<compile_context>
chip_gen: v7x
topology: tpu7x:2x2x1
jax: 0.10.0
libtpu: 0.0.40
codegen_flags: <defaults>
</compile_context>

<pallas_src>
import functools

import jax
import jax.numpy as jnp
import numpy as np
from jax.experimental import pallas as pl
from jax.experimental.pallas import tpu as pltpu

LANE = 128


def _round_up(v, m):
    return ((v + m - 1) // m) * m


# ----------------------------------------------------------------------------
# Fused kernel: whole GraphConv stack for ONE batch element per grid step.
# ----------------------------------------------------------------------------
def _fused_graphkv_kernel(x_ref, adj_ref, *refs, n_layers, n_edges):
    """
    x_ref   : [N, n_in]      f32
    adj_ref : [E*N, N]       bf16 (0/1 -> exact), edge axis folded into rows
    refs    : per layer (w_self [Cin,Cout], w_edge [E*Cin,Cout], bias [1,Cout]),
              then o_ref
    o_ref   : [N, Cout_pad]  f32, lane-dense (final width padded to multiple of 128)
    """
    o_ref = refs[-1]
    E = n_edges
    N = x_ref.shape[0]

    # Upcast the binary adjacency ONCE; it stays resident for all layers.
    adj2d = adj_ref[...].astype(jnp.float32)                           # [E*N, N]

    h = x_ref[...]                                                     # [N, C0]
    for i in range(n_layers):                                          # static unroll
        w_self = refs[3 * i][...]                                      # [Cin, Cout]
        w_edge = refs[3 * i + 1][...]                                  # [E*Cin, Cout]
        bias = refs[3 * i + 2][...]                                    # [1, Cout]
        cin = w_self.shape[0]

        # All E edge-type aggregations in one MXU matmul.
        agg = jnp.dot(adj2d, h, preferred_element_type=jnp.float32)    # [E*N, Cin]

        # Split-W accumulation == concat([h, A_1 h, ..., A_E h]) @ W + b,
        # without the lane-axis concatenate.
        out = jnp.dot(h, w_self, preferred_element_type=jnp.float32) + bias
        for e in range(E):                                             # static unroll
            out = out + jnp.dot(
                agg[e * N:(e + 1) * N, :],
                w_edge[e * cin:(e + 1) * cin, :],
                preferred_element_type=jnp.float32,
            )

        if i < n_layers - 1:                                           # ReLU, all but last
            out = jnp.maximum(out, 0.0)
        h = out

    o_ref[...] = h.astype(o_ref.dtype)


# ----------------------------------------------------------------------------
# Wrapper: one pallas_call for the whole network.
# ----------------------------------------------------------------------------
def graphkv_forward(params, x, adj_benn):
    """Fused GraphKV forward (eval mode).

    x        : [B, N, n_in]  float32
    adj_benn : [B, E, N, N]  0/1 adjacency per edge type
    returns  : [B, N, n_classes] per-node logits
    """
    B, N, n_in = x.shape
    _, E, _, _ = adj_benn.shape
    n_layers = len(params)
    n_classes = params[-1][0].shape[1]
    out_pad = _round_up(n_classes, LANE)

    # Binary adjacency -> bf16 is bit-exact and halves HBM/VMEM bytes on the
    # dominant operand.  Fold the edge axis into rows (free, contiguous reshape
    # in HBM) so the kernel needs no in-kernel reshape.
    # TODO(synk): for another 2x density use int8 adjacency on v5e/v6e and
    # fp8 (e4m3) on v7x (v7x MXU has no int path).
    adj_flat = adj_benn.astype(jnp.bfloat16).reshape(B, E * N, N)

    flat_inputs = [x, adj_flat]
    in_specs = [
        pl.BlockSpec((None, N, n_in), lambda b: (b, 0, 0)),
        pl.BlockSpec((None, E * N, N), lambda b: (b, 0, 0)),
    ]

    flops = 0
    weight_bytes = 0
    for i, (w, bvec) in enumerate(params):
        cin_cat, cout = w.shape
        cin = cin_cat // (E + 1)
        assert cin_cat == (E + 1) * cin
        if i == n_layers - 1 and cout != out_pad:
            # Zero-pad the final projection to a lane-dense width (numerically exact);
            # only unmasked vst stores hit HBM, wrapper slices logits back out.
            w = jnp.pad(w, ((0, 0), (0, out_pad - cout)))
            bvec = jnp.pad(bvec, ((0, 0), (0, out_pad - cout)))
            cout = out_pad
        w_self = w[:cin]          # rows for the identity ("x") term
        w_edge = w[cin:]          # rows for [A_1 x, ..., A_E x]  -> [E*Cin, Cout]
        flat_inputs += [w_self, w_edge, bvec]
        in_specs += [
            pl.BlockSpec((cin, cout), lambda b: (0, 0)),
            pl.BlockSpec((E * cin, cout), lambda b: (0, 0)),
            pl.BlockSpec((1, cout), lambda b: (0, 0)),
        ]
        weight_bytes += int(w_self.size + w_edge.size + bvec.size) * 4
        flops += 2 * B * (E * N * N * cin + (E + 1) * N * cin * cout)

    bytes_accessed = (
        int(x.size) * 4 + int(adj_flat.size) * 2 + weight_bytes + B * N * out_pad * 4
    )

    kernel = functools.partial(_fused_graphkv_kernel, n_layers=n_layers, n_edges=E)
    out_padded = pl.pallas_call(
        kernel,
        out_shape=jax.ShapeDtypeStruct((B, N, out_pad), jnp.float32),
        grid=(B,),
        in_specs=in_specs,
        out_specs=pl.BlockSpec((None, N, out_pad), lambda b: (b, 0, 0)),
        compiler_params=pltpu.CompilerParams(dimension_semantics=("parallel",)),
        cost_estimate=pl.CostEstimate(
            flops=flops, transcendentals=0, bytes_accessed=bytes_accessed
        ),
    )(*flat_inputs)

    # TODO(synk): for large N on v7x (64 MiB VMEM) tile the adjacency over edge types /
    # node rows and raise vmem_limit_bytes; at these shapes the full block fits easily.
    return out_padded[:, :, :n_classes]


# ----------------------------------------------------------------------------
# Params + pure-JAX reference (concat formulation) for correctness checking.
# ----------------------------------------------------------------------------
def init_params(key, n_in, n_classes, n_edges, net_size):
    half = net_size // 2
    dims = [(n_in, half), (half, half), (half, net_size), (net_size, n_classes)]
    params = []
    for cin, cout in dims:
        key, kw = jax.random.split(key)
        fan_in = (n_edges + 1) * cin
        w = jax.random.normal(kw, (fan_in, cout), jnp.float32) * (1.0 / np.sqrt(fan_in))
        bvec = jnp.zeros((1, cout), jnp.float32)
        params.append((w, bvec))
    return params


def graphkv_reference(params, x, adj_benn):
    h = x
    n_layers = len(params)
    for i, (w, b) in enumerate(params):
        agg = jnp.einsum("benm,bmc->benc", adj_benn, h)             # [B,E,N,C]
        B, E, N, C = agg.shape
        agg = jnp.transpose(agg, (0, 2, 1, 3)).reshape(B, N, E * C)
        cat = jnp.concatenate([h, agg], axis=-1)                    # [B,N,(E+1)*C]
        h = jnp.einsum("bnk,ko->bno", cat, w) + b[0]
        if i < n_layers - 1:
            h = jnp.maximum(h, 0.0)
    return h


if __name__ == "__main__":
    # Small synthetic hparams consistent with the module's __init__:
    #   n_in, n_classes, n_edges, net_size
    B, N = 2, 16
    n_in, n_classes, n_edges, net_size = 8, 5, 2, 32

    key = jax.random.PRNGKey(0)
    kx, ka, kp = jax.random.split(key, 3)

    # Inputs in the PyTorch convention: x [B,N,n_in], adj [B,N,n_edges,N]
    x = jax.random.normal(kx, (B, N, n_in), jnp.float32)
    adj_bnen = (jax.random.uniform(ka, (B, N, n_edges, N)) < 0.25).astype(jnp.float32)

    # Glue: transpose adjacency to [B, E, N, N].
    adj_benn = jnp.transpose(adj_bnen, (0, 2, 1, 3))

    params = init_params(kp, n_in, n_classes, n_edges, net_size)

    logits = graphkv_forward(params, x, adj_benn)
    logits = jax.block_until_ready(logits)

    ref = graphkv_reference(params, x, adj_benn)
    np.testing.assert_allclose(np.asarray(logits), np.asarray(ref), rtol=1e-5, atol=1e-4)

    assert logits.shape == (B, N, n_classes)
    print("KERNEL_OK")
</pallas_src>

<mosaic_0001>
module attributes {stable_mosaic.version = 11 : i64} {
  func.func @_fused_graphkv_kernel(%arg0: i32, %arg1: memref<1x16x8xf32, #tpu.memory_space<vmem>>, %arg2: memref<1x32x16xbf16, #tpu.memory_space<vmem>>, %arg3: memref<8x16xf32, #tpu.memory_space<vmem>>, %arg4: memref<16x16xf32, #tpu.memory_space<vmem>>, %arg5: memref<1x16xf32, #tpu.memory_space<vmem>>, %arg6: memref<16x16xf32, #tpu.memory_space<vmem>>, %arg7: memref<32x16xf32, #tpu.memory_space<vmem>>, %arg8: memref<1x16xf32, #tpu.memory_space<vmem>>, %arg9: memref<16x32xf32, #tpu.memory_space<vmem>>, %arg10: memref<32x32xf32, #tpu.memory_space<vmem>>, %arg11: memref<1x32xf32, #tpu.memory_space<vmem>>, %arg12: memref<32x128xf32, #tpu.memory_space<vmem>>, %arg13: memref<64x128xf32, #tpu.memory_space<vmem>>, %arg14: memref<1x128xf32, #tpu.memory_space<vmem>>, %arg15: memref<1x16x128xf32, #tpu.memory_space<vmem>>) attributes {dimension_semantics = [#tpu.dimension_semantics<parallel>], iteration_bounds = array<i64: 2>, scalar_prefetch = 0 : i64, scratch_operands = 0 : i64, tpu.core_type = #tpu.core_type<tc>, window_params = [{transform_indices = @transform_0, window_bounds = array<i64: 1, 16, 8>}, {transform_indices = @transform_1, window_bounds = array<i64: 1, 32, 16>}, {pipeline_mode = #tpu.pipeline_mode<synchronous>, transform_indices = @transform_2, window_bounds = array<i64: 8, 16>}, {pipeline_mode = #tpu.pipeline_mode<synchronous>, transform_indices = @transform_3, window_bounds = array<i64: 16, 16>}, {pipeline_mode = #tpu.pipeline_mode<synchronous>, transform_indices = @transform_4, window_bounds = array<i64: 1, 16>}, {pipeline_mode = #tpu.pipeline_mode<synchronous>, transform_indices = @transform_5, window_bounds = array<i64: 16, 16>}, {pipeline_mode = #tpu.pipeline_mode<synchronous>, transform_indices = @transform_6, window_bounds = array<i64: 32, 16>}, {pipeline_mode = #tpu.pipeline_mode<synchronous>, transform_indices = @transform_7, window_bounds = array<i64: 1, 16>}, {pipeline_mode = #tpu.pipeline_mode<synchronous>, transform_indices = @transform_8, window_bounds = array<i64: 16, 32>}, {pipeline_mode = #tpu.pipeline_mode<synchronous>, transform_indices = @transform_9, window_bounds = array<i64: 32, 32>}, {pipeline_mode = #tpu.pipeline_mode<synchronous>, transform_indices = @transform_10, window_bounds = array<i64: 1, 32>}, {pipeline_mode = #tpu.pipeline_mode<synchronous>, transform_indices = @transform_11, window_bounds = array<i64: 32, 128>}, {pipeline_mode = #tpu.pipeline_mode<synchronous>, transform_indices = @transform_12, window_bounds = array<i64: 64, 128>}, {pipeline_mode = #tpu.pipeline_mode<synchronous>, transform_indices = @transform_13, window_bounds = array<i64: 1, 128>}, {transform_indices = @transform_14, window_bounds = array<i64: 1, 16, 128>}]} {
    %c0 = arith.constant 0 : index
    %c0_0 = arith.constant 0 : index
    %c0_1 = arith.constant 0 : index
    %0 = vector.load %arg2[%c0, %c0_0, %c0_1] : memref<1x32x16xbf16, #tpu.memory_space<vmem>>, vector<1x32x16xbf16>
    %1 = vector.shape_cast %0 : vector<1x32x16xbf16> to vector<32x16xbf16>
    %2 = arith.extf %1 : vector<32x16xbf16> to vector<32x16xf32>
    %c0_2 = arith.constant 0 : index
    %c0_3 = arith.constant 0 : index
    %c0_4 = arith.constant 0 : index
    %3 = vector.load %arg1[%c0_2, %c0_3, %c0_4] : memref<1x16x8xf32, #tpu.memory_space<vmem>>, vector<1x16x8xf32>
    %4 = vector.shape_cast %3 : vector<1x16x8xf32> to vector<16x8xf32>
    %c0_5 = arith.constant 0 : index
    %c0_6 = arith.constant 0 : index
    %5 = vector.load %arg3[%c0_5, %c0_6] : memref<8x16xf32, #tpu.memory_space<vmem>>, vector<8x16xf32>
    %c0_7 = arith.constant 0 : index
    %c0_8 = arith.constant 0 : index
    %6 = vector.load %arg4[%c0_7, %c0_8] : memref<16x16xf32, #tpu.memory_space<vmem>>, vector<16x16xf32>
    %c0_9 = arith.constant 0 : index
    %c0_10 = arith.constant 0 : index
    %7 = vector.load %arg5[%c0_9, %c0_10] : memref<1x16xf32, #tpu.memory_space<vmem>>, vector<1x16xf32>
    %cst = arith.constant dense<0.000000e+00> : vector<32x8xf32>
    %8 = tpu.matmul %2, %4, %cst {dimension_numbers = #tpu.dot_dimension_numbers<[1], [0], [0], [1], [0, 0, 1, 1], [], []>} : vector<32x16xf32>, vector<16x8xf32>, vector<32x8xf32> -> vector<32x8xf32>
    %cst_11 = arith.constant dense<0.000000e+00> : vector<16x16xf32>
    %9 = tpu.matmul %4, %5, %cst_11 {dimension_numbers = #tpu.dot_dimension_numbers<[1], [0], [0], [1], [0, 0, 1, 1], [], []>} : vector<16x8xf32>, vector<8x16xf32>, vector<16x16xf32> -> vector<16x16xf32>
    %10 = vector.broadcast %7 : vector<1x16xf32> to vector<16x16xf32>
    %11 = arith.addf %9, %10 : vector<16x16xf32>
    %12 = vector.extract_strided_slice %8 {offsets = [0, 0], sizes = [16, 8], strides = [1, 1]} : vector<32x8xf32> to vector<16x8xf32>
    %13 = vector.extract_strided_slice %6 {offsets = [0, 0], sizes = [8, 16], strides = [1, 1]} : vector<16x16xf32> to vector<8x16xf32>
    %cst_12 = arith.constant dense<0.000000e+00> : vector<16x16xf32>
    %14 = tpu.matmul %12, %13, %cst_12 {dimension_numbers = #tpu.dot_dimension_numbers<[1], [0], [0], [1], [0, 0, 1, 1], [], []>} : vector<16x8xf32>, vector<8x16xf32>, vector<16x16xf32> -> vector<16x16xf32>
    %15 = arith.addf %11, %14 : vector<16x16xf32>
    %16 = vector.extract_strided_slice %8 {offsets = [16, 0], sizes = [16, 8], strides = [1, 1]} : vector<32x8xf32> to vector<16x8xf32>
    %17 = vector.extract_strided_slice %6 {offsets = [8, 0], sizes = [8, 16], strides = [1, 1]} : vector<16x16xf32> to vector<8x16xf32>
    %cst_13 = arith.constant dense<0.000000e+00> : vector<16x16xf32>
    %18 = tpu.matmul %16, %17, %cst_13 {dimension_numbers = #tpu.dot_dimension_numbers<[1], [0], [0], [1], [0, 0, 1, 1], [], []>} : vector<16x8xf32>, vector<8x16xf32>, vector<16x16xf32> -> vector<16x16xf32>
    %19 = arith.addf %15, %18 : vector<16x16xf32>
    %cst_14 = arith.constant 0.000000e+00 : f32
    %20 = vector.broadcast %cst_14 : f32 to vector<16x16xf32>
    %21 = arith.maximumf %19, %20 : vector<16x16xf32>
    %c0_15 = arith.constant 0 : index
    %c0_16 = arith.constant 0 : index
    %22 = vector.load %arg6[%c0_15, %c0_16] : memref<16x16xf32, #tpu.memory_space<vmem>>, vector<16x16xf32>
    %c0_17 = arith.constant 0 : index
    %c0_18 = arith.constant 0 : index
    %23 = vector.load %arg7[%c0_17, %c0_18] : memref<32x16xf32, #tpu.memory_space<vmem>>, vector<32x16xf32>
    %c0_19 = arith.constant 0 : index
    %c0_20 = arith.constant 0 : index
    %24 = vector.load %arg8[%c0_19, %c0_20] : memref<1x16xf32, #tpu.memory_space<vmem>>, vector<1x16xf32>
    %cst_21 = arith.constant dense<0.000000e+00> : vector<32x16xf32>
    %25 = tpu.matmul %2, %21, %cst_21 {dimension_numbers = #tpu.dot_dimension_numbers<[1], [0], [0], [1], [0, 0, 1, 1], [], []>} : vector<32x16xf32>, vector<16x16xf32>, vector<32x16xf32> -> vector<32x16xf32>
    %cst_22 = arith.constant dense<0.000000e+00> : vector<16x16xf32>
    %26 = tpu.matmul %21, %22, %cst_22 {dimension_numbers = #tpu.dot_dimension_numbers<[1], [0], [0], [1], [0, 0, 1, 1], [], []>} : vector<16x16xf32>, vector<16x16xf32>, vector<16x16xf32> -> vector<16x16xf32>
    %27 = vector.broadcast %24 : vector<1x16xf32> to vector<16x16xf32>
    %28 = arith.addf %26, %27 : vector<16x16xf32>
    %29 = vector.extract_strided_slice %25 {offsets = [0, 0], sizes = [16, 16], strides = [1, 1]} : vector<32x16xf32> to vector<16x16xf32>
    %30 = vector.extract_strided_slice %23 {offsets = [0, 0], sizes = [16, 16], strides = [1, 1]} : vector<32x16xf32> to vector<16x16xf32>
    %cst_23 = arith.constant dense<0.000000e+00> : vector<16x16xf32>
    %31 = tpu.matmul %29, %30, %cst_23 {dimension_numbers = #tpu.dot_dimension_numbers<[1], [0], [0], [1], [0, 0, 1, 1], [], []>} : vector<16x16xf32>, vector<16x16xf32>, vector<16x16xf32> -> vector<16x16xf32>
    %32 = arith.addf %28, %31 : vector<16x16xf32>
    %33 = vector.extract_strided_slice %25 {offsets = [16, 0], sizes = [16, 16], strides = [1, 1]} : vector<32x16xf32> to vector<16x16xf32>
    %34 = vector.extract_strided_slice %23 {offsets = [16, 0], sizes = [16, 16], strides = [1, 1]} : vector<32x16xf32> to vector<16x16xf32>
    %cst_24 = arith.constant dense<0.000000e+00> : vector<16x16xf32>
    %35 = tpu.matmul %33, %34, %cst_24 {dimension_numbers = #tpu.dot_dimension_numbers<[1], [0], [0], [1], [0, 0, 1, 1], [], []>} : vector<16x16xf32>, vector<16x16xf32>, vector<16x16xf32> -> vector<16x16xf32>
    %36 = arith.addf %32, %35 : vector<16x16xf32>
    %cst_25 = arith.constant 0.000000e+00 : f32
    %37 = vector.broadcast %cst_25 : f32 to vector<16x16xf32>
    %38 = arith.maximumf %36, %37 : vector<16x16xf32>
    %c0_26 = arith.constant 0 : index
    %c0_27 = arith.constant 0 : index
    %39 = vector.load %arg9[%c0_26, %c0_27] : memref<16x32xf32, #tpu.memory_space<vmem>>, vector<16x32xf32>
    %c0_28 = arith.constant 0 : index
    %c0_29 = arith.constant 0 : index
    %40 = vector.load %arg10[%c0_28, %c0_29] : memref<32x32xf32, #tpu.memory_space<vmem>>, vector<32x32xf32>
    %c0_30 = arith.constant 0 : index
    %c0_31 = arith.constant 0 : index
    %41 = vector.load %arg11[%c0_30, %c0_31] : memref<1x32xf32, #tpu.memory_space<vmem>>, vector<1x32xf32>
    %cst_32 = arith.constant dense<0.000000e+00> : vector<32x16xf32>
    %42 = tpu.matmul %2, %38, %cst_32 {dimension_numbers = #tpu.dot_dimension_numbers<[1], [0], [0], [1], [0, 0, 1, 1], [], []>} : vector<32x16xf32>, vector<16x16xf32>, vector<32x16xf32> -> vector<32x16xf32>
    %cst_33 = arith.constant dense<0.000000e+00> : vector<16x32xf32>
    %43 = tpu.matmul %38, %39, %cst_33 {dimension_numbers = #tpu.dot_dimension_numbers<[1], [0], [0], [1], [0, 0, 1, 1], [], []>} : vector<16x16xf32>, vector<16x32xf32>, vector<16x32xf32> -> vector<16x32xf32>
    %44 = vector.broadcast %41 : vector<1x32xf32> to vector<16x32xf32>
    %45 = arith.addf %43, %44 : vector<16x32xf32>
    %46 = vector.extract_strided_slice %42 {offsets = [0, 0], sizes = [16, 16], strides = [1, 1]} : vector<32x16xf32> to vector<16x16xf32>
    %47 = vector.extract_strided_slice %40 {offsets = [0, 0], sizes = [16, 32], strides = [1, 1]} : vector<32x32xf32> to vector<16x32xf32>
    %cst_34 = arith.constant dense<0.000000e+00> : vector<16x32xf32>
    %48 = tpu.matmul %46, %47, %cst_34 {dimension_numbers = #tpu.dot_dimension_numbers<[1], [0], [0], [1], [0, 0, 1, 1], [], []>} : vector<16x16xf32>, vector<16x32xf32>, vector<16x32xf32> -> vector<16x32xf32>
    %49 = arith.addf %45, %48 : vector<16x32xf32>
    %50 = vector.extract_strided_slice %42 {offsets = [16, 0], sizes = [16, 16], strides = [1, 1]} : vector<32x16xf32> to vector<16x16xf32>
    %51 = vector.extract_strided_slice %40 {offsets = [16, 0], sizes = [16, 32], strides = [1, 1]} : vector<32x32xf32> to vector<16x32xf32>
    %cst_35 = arith.constant dense<0.000000e+00> : vector<16x32xf32>
    %52 = tpu.matmul %50, %51, %cst_35 {dimension_numbers = #tpu.dot_dimension_numbers<[1], [0], [0], [1], [0, 0, 1, 1], [], []>} : vector<16x16xf32>, vector<16x32xf32>, vector<16x32xf32> -> vector<16x32xf32>
    %53 = arith.addf %49, %52 : vector<16x32xf32>
    %cst_36 = arith.constant 0.000000e+00 : f32
    %54 = vector.broadcast %cst_36 : f32 to vector<16x32xf32>
    %55 = arith.maximumf %53, %54 : vector<16x32xf32>
    %c0_37 = arith.constant 0 : index
    %c0_38 = arith.constant 0 : index
    %56 = vector.load %arg12[%c0_37, %c0_38] : memref<32x128xf32, #tpu.memory_space<vmem>>, vector<32x128xf32>
    %c0_39 = arith.constant 0 : index
    %c0_40 = arith.constant 0 : index
    %57 = vector.load %arg13[%c0_39, %c0_40] : memref<64x128xf32, #tpu.memory_space<vmem>>, vector<64x128xf32>
    %c0_41 = arith.constant 0 : index
    %c0_42 = arith.constant 0 : index
    %58 = vector.load %arg14[%c0_41, %c0_42] : memref<1x128xf32, #tpu.memory_space<vmem>>, vector<1x128xf32>
    %cst_43 = arith.constant dense<0.000000e+00> : vector<32x32xf32>
    %59 = tpu.matmul %2, %55, %cst_43 {dimension_numbers = #tpu.dot_dimension_numbers<[1], [0], [0], [1], [0, 0, 1, 1], [], []>} : vector<32x16xf32>, vector<16x32xf32>, vector<32x32xf32> -> vector<32x32xf32>
    %cst_44 = arith.constant dense<0.000000e+00> : vector<16x128xf32>
    %60 = tpu.matmul %55, %56, %cst_44 {dimension_numbers = #tpu.dot_dimension_numbers<[1], [0], [0], [1], [0, 0, 1, 1], [], []>} : vector<16x32xf32>, vector<32x128xf32>, vector<16x128xf32> -> vector<16x128xf32>
    %61 = vector.broadcast %58 : vector<1x128xf32> to vector<16x128xf32>
    %62 = arith.addf %60, %61 : vector<16x128xf32>
    %63 = vector.extract_strided_slice %59 {offsets = [0, 0], sizes = [16, 32], strides = [1, 1]} : vector<32x32xf32> to vector<16x32xf32>
    %64 = vector.extract_strided_slice %57 {offsets = [0, 0], sizes = [32, 128], strides = [1, 1]} : vector<64x128xf32> to vector<32x128xf32>
    %cst_45 = arith.constant dense<0.000000e+00> : vector<16x128xf32>
    %65 = tpu.matmul %63, %64, %cst_45 {dimension_numbers = #tpu.dot_dimension_numbers<[1], [0], [0], [1], [0, 0, 1, 1], [], []>} : vector<16x32xf32>, vector<32x128xf32>, vector<16x128xf32> -> vector<16x128xf32>
    %66 = arith.addf %62, %65 : vector<16x128xf32>
    %67 = vector.extract_strided_slice %59 {offsets = [16, 0], sizes = [16, 32], strides = [1, 1]} : vector<32x32xf32> to vector<16x32xf32>
    %68 = vector.extract_strided_slice %57 {offsets = [32, 0], sizes = [32, 128], strides = [1, 1]} : vector<64x128xf32> to vector<32x128xf32>
    %cst_46 = arith.constant dense<0.000000e+00> : vector<16x128xf32>
    %69 = tpu.matmul %67, %68, %cst_46 {dimension_numbers = #tpu.dot_dimension_numbers<[1], [0], [0], [1], [0, 0, 1, 1], [], []>} : vector<16x32xf32>, vector<32x128xf32>, vector<16x128xf32> -> vector<16x128xf32>
    %70 = arith.addf %66, %69 : vector<16x128xf32>
    %c0_47 = arith.constant 0 : index
    %c0_48 = arith.constant 0 : index
    %c0_49 = arith.constant 0 : index
    %71 = vector.load %arg15[%c0_47, %c0_48, %c0_49] : memref<1x16x128xf32, #tpu.memory_space<vmem>>, vector<1x16x128xf32>
    %72 = vector.shape_cast %71 : vector<1x16x128xf32> to vector<16x128xf32>
    %73 = vector.shape_cast %70 : vector<16x128xf32> to vector<1x16x128xf32>
    tpu.vector_store %arg15[%c0_47, %c0_48, %c0_49], %73 {strides = array<i32>} : memref<1x16x128xf32, #tpu.memory_space<vmem>>, vector<1x16x128xf32>,
    return
  }
  func.func @transform_0(%arg0: i32) -> (i32, i32, i32) {
    %c0_i32 = arith.constant 0 : i32
    %c0_i32_0 = arith.constant 0 : i32
    %c0_i32_1 = arith.constant 0 : i32
    return %arg0, %c0_i32, %c0_i32_0 : i32, i32, i32
  }
  func.func @transform_1(%arg0: i32) -> (i32, i32, i32) {
    %c0_i32 = arith.constant 0 : i32
    %c0_i32_0 = arith.constant 0 : i32
    %c0_i32_1 = arith.constant 0 : i32
    return %arg0, %c0_i32, %c0_i32_0 : i32, i32, i32
  }
  func.func @transform_2(%arg0: i32) -> (i32, i32) {
    %c0_i32 = arith.constant 0 : i32
    %c0_i32_0 = arith.constant 0 : i32
    %c0_i32_1 = arith.constant 0 : i32
    return %c0_i32, %c0_i32_0 : i32, i32
  }
  func.func @transform_3(%arg0: i32) -> (i32, i32) {
    %c0_i32 = arith.constant 0 : i32
    %c0_i32_0 = arith.constant 0 : i32
    %c0_i32_1 = arith.constant 0 : i32
    return %c0_i32, %c0_i32_0 : i32, i32
  }
  func.func @transform_4(%arg0: i32) -> (i32, i32) {
    %c0_i32 = arith.constant 0 : i32
    %c0_i32_0 = arith.constant 0 : i32
    %c0_i32_1 = arith.constant 0 : i32
    return %c0_i32, %c0_i32_0 : i32, i32
  }
  func.func @transform_5(%arg0: i32) -> (i32, i32) {
    %c0_i32 = arith.constant 0 : i32
    %c0_i32_0 = arith.constant 0 : i32
    %c0_i32_1 = arith.constant 0 : i32
    return %c0_i32, %c0_i32_0 : i32, i32
  }
  func.func @transform_6(%arg0: i32) -> (i32, i32) {
    %c0_i32 = arith.constant 0 : i32
    %c0_i32_0 = arith.constant 0 : i32
    %c0_i32_1 = arith.constant 0 : i32
    return %c0_i32, %c0_i32_0 : i32, i32
  }
  func.func @transform_7(%arg0: i32) -> (i32, i32) {
    %c0_i32 = arith.constant 0 : i32
    %c0_i32_0 = arith.constant 0 : i32
    %c0_i32_1 = arith.constant 0 : i32
    return %c0_i32, %c0_i32_0 : i32, i32
  }
  func.func @transform_8(%arg0: i32) -> (i32, i32) {
    %c0_i32 = arith.constant 0 : i32
    %c0_i32_0 = arith.constant 0 : i32
    %c0_i32_1 = arith.constant 0 : i32
    return %c0_i32, %c0_i32_0 : i32, i32
  }
  func.func @transform_9(%arg0: i32) -> (i32, i32) {
    %c0_i32 = arith.constant 0 : i32
    %c0_i32_0 = arith.constant 0 : i32
    %c0_i32_1 = arith.constant 0 : i32
    return %c0_i32, %c0_i32_0 : i32, i32
  }
  func.func @transform_10(%arg0: i32) -> (i32, i32) {
    %c0_i32 = arith.constant 0 : i32
    %c0_i32_0 = arith.constant 0 : i32
    %c0_i32_1 = arith.constant 0 : i32
    return %c0_i32, %c0_i32_0 : i32, i32
  }
  func.func @transform_11(%arg0: i32) -> (i32, i32) {
    %c0_i32 = arith.constant 0 : i32
    %c0_i32_0 = arith.constant 0 : i32
    %c0_i32_1 = arith.constant 0 : i32
    return %c0_i32, %c0_i32_0 : i32, i32
  }
  func.func @transform_12(%arg0: i32) -> (i32, i32) {
    %c0_i32 = arith.constant 0 : i32
    %c0_i32_0 = arith.constant 0 : i32
    %c0_i32_1 = arith.constant 0 : i32
    return %c0_i32, %c0_i32_0 : i32, i32
  }
  func.func @transform_13(%arg0: i32) -> (i32, i32) {
    %c0_i32 = arith.constant 0 : i32
    %c0_i32_0 = arith.constant 0 : i32
    %c0_i32_1 = arith.constant 0 : i32
    return %c0_i32, %c0_i32_0 : i32, i32
  }
  func.func @transform_14(%arg0: i32) -> (i32, i32, i32) {
    %c0_i32 = arith.constant 0 : i32
    %c0_i32_0 = arith.constant 0 : i32
    %c0_i32_1 = arith.constant 0 : i32
    return %arg0, %c0_i32, %c0_i32_0 : i32, i32, i32
  }
}

</mosaic_0001>

<llo_original>
// kernel: tpu_custom_call.1
$region0: #{tpu_custom_call.1}
  #allocation0 [shape = 'u32[]', space=smem, size = 0x4, offset = 0x4, fixed_abs, tag = 'smem constant byte address 0x4 - core index']
  #allocation1 [shape = 'u32[144,128]{1,0:T(1,128)}', space=vmem, size = 0x12000, scoped, tag = 'internal scratch']
  %s0 = inlined_call_operand.vmem [shape: f32[2,16,8], index: 0, kind: input, shape index: {}]
  %s1 = inlined_call_operand.vmem [shape: bf16[2,32,16], index: 1, kind: input, shape index: {}]
  %s2 = inlined_call_operand.hbm [shape: f32[8,16], index: 2, kind: input, shape index: {}]
  %s3 = inlined_call_operand.hbm [shape: f32[16,16], index: 3, kind: input, shape index: {}]
  %s4 = inlined_call_operand.vmem [shape: f32[1,16], index: 4, kind: input, shape index: {}]
  %s5 = inlined_call_operand.hbm [shape: f32[16,16], index: 5, kind: input, shape index: {}]
  %s6 = inlined_call_operand.vmem [shape: f32[32,16], index: 6, kind: input, shape index: {}]
  %s7 = inlined_call_operand.vmem [shape: f32[1,16], index: 7, kind: input, shape index: {}]
  %s8 = inlined_call_operand.hbm [shape: f32[16,32], index: 8, kind: input, shape index: {}]
  %s9 = inlined_call_operand.vmem [shape: f32[32,32], index: 9, kind: input, shape index: {}]
  %s10 = inlined_call_operand.vmem [shape: f32[1,32], index: 10, kind: input, shape index: {}]
  %s11 = inlined_call_operand.vmem [shape: f32[32,128], index: 11, kind: input, shape index: {}]
  %s12 = inlined_call_operand.vmem [shape: f32[64,128], index: 12, kind: input, shape index: {}]
  %s13 = inlined_call_operand.vmem [shape: f32[1,128], index: 13, kind: input, shape index: {}]
  %s14 = inlined_call_operand.hbm [shape: f32[2,16,128], index: 14, kind: output, shape index: {}]
  %s15 = sld [smem:[#allocation0]]
  $region105: #{tpu_custom_call.1} parent=0
    _
  %s17 = ssub.s32 1, %s15
  %s18 = scalar_select 0, %s17, %s15
  $region1: #{tpu_custom_call.1} parent=0
    #allocation2 [shape = 'u8[4096]{0}', space=vmem, size = 0x1000, scoped, tag = 'input window, operand 2, single buffered']
    #allocation3 [shape = 's32[2]{0}', space=sflag, size = 0x8, scoped, tag = 'scoped memory for tpu_custom_call.1']
    #allocation4 [shape = 's32[2]{0}', space=sflag, size = 0x8, scoped, tag = 'scoped memory for tpu_custom_call.1']
    #allocation5 [shape = 'u8[8192]{0}', space=vmem, size = 0x2000, scoped, tag = 'input window, operand 3, single buffered']
    #allocation6 [shape = 's32[1]{0}', space=sflag, size = 0x4, scoped, tag = 'scoped memory for tpu_custom_call.1']
    #allocation7 [shape = 'u8[8192]{0}', space=vmem, size = 0x2000, scoped, tag = 'input window, operand 5, single buffered']
    #allocation8 [shape = 'u8[8192]{0}', space=vmem, size = 0x2000, scoped, tag = 'input window, operand 8, single buffered']
    #allocation9 [shape = 's32[1]{0}', space=sflag, size = 0x4, scoped, tag = 'scoped memory for tpu_custom_call.1']
    #allocation10 [shape = 'u8[16384]{0}', space=vmem, size = 0x4000, scoped, tag = 'output window, operand 0']
    %19 = vsyncpa [#allocation3], 0
    %20 = vsyncpa [#allocation6], 0
    %21 = vsyncpa [#allocation9], 0
    %22 = vsyncpa [#allocation4], 0
    %s23 = scalar_lea.sflag [#allocation4], 1
    %24 = vsyncpa %s23, 0
    loop: start=0, step=1, limit=4
    $region2: #{tpu_custom_call.1} parent=1 // loop_pre_header
      _
    $region3: #{tpu_custom_call.1} parent=1 // loop_header
      %s26 = sphi 0, %s30
      %p27 = scmp.ge.s32.totalorder %s26, 4
      %s36 = sphi 0, %s38
      %s39 = sphi 0, %s36
      %s40 = sphi 0, %s39
      %s56 = sphi 0, %s40
      %s62 = sphi 0, %s64
      %s65 = sphi 0, %s62
      %s66 = sphi 0, %s65
      %s82 = sphi 0, %s66
      %s86 = sphi 0, %s86
      %s88 = sphi 0, %s86
      %s89 = sphi 0, %s88
      %s103 = sphi 0, %s89
      %s107 = sphi 0, %s107
      %s109 = sphi 0, %s107
      %s110 = sphi 0, %s109
      %s124 = sphi 0, %s110
      %s128 = sphi 0, %s128
      %s130 = sphi 0, %s128
      %s131 = sphi 0, %s130
      %s145 = sphi 0, %s131
      %s149 = sphi 0, %s149
      %s151 = sphi 0, %s149
      %s152 = sphi 0, %s151
      %s166 = sphi 0, %s152
      %s170 = sphi 0, %s170
      %s172 = sphi 0, %s170
      %s173 = sphi 0, %s172
      %s187 = sphi 0, %s173
      %s191 = sphi 0, %s191
      %s193 = sphi 0, %s191
      %s194 = sphi 0, %s193
      %s208 = sphi 0, %s194
      %s212 = sphi 0, %s212
      %s214 = sphi 0, %s212
      %s215 = sphi 0, %s214
      %s229 = sphi 0, %s215
      %s233 = sphi 0, %s233
      %s235 = sphi 0, %s233
      %s236 = sphi 0, %s235
      %s250 = sphi 0, %s236
      %s254 = sphi 0, %s254
      %s256 = sphi 0, %s254
      %s257 = sphi 0, %s256
      %s271 = sphi 0, %s257
      %s275 = sphi 0, %s275
      %s277 = sphi 0, %s275
      %s278 = sphi 0, %s277
      %s292 = sphi 0, %s278
      %s296 = sphi 0, %s296
      %s298 = sphi 0, %s296
      %s299 = sphi 0, %s298
      %s313 = sphi 0, %s299
      %s317 = sphi 0, %s317
      %s319 = sphi 0, %s317
      %s320 = sphi 0, %s319
      %s334 = sphi 0, %s320
      %s340 = sphi 0, %s342
      %s343 = sphi 0, %s340
      %s344 = sphi 0, %s343
      %s360 = sphi 0, %s344
    $region4: #{tpu_custom_call.1} parent=1 // loop_header_branch
      %29 = sbr.rel (%p27) target = $region8
    $region5: #{tpu_custom_call.1} parent=1 // loop_body
      %s31 = ssub.s32 %s26, 1
      %s32 = ssub.s32 %s26, 2
      %s33 = sadd.s32 %s26, 1
      %s34 = ssub.s32 %s26, %s33
      %p35 = scmp.eq.s32.totalorder %s34, 0
      %s37 = sadd.s32 %s36, 1
      %s38 = scalar_select %p35, %s36, %s37
      %p41 = pneg %p35
      %p42 = scmp.eq.s32.totalorder %s26, 1
      %p43 = por %p41, %p42
      %p44 = scmp.ne.s32.totalorder %s36, %s39
      %p45 = scmp.eq.s32.totalorder %s26, 0
      %p46 = por %p44, %p45
      %p47 = scmp.ne.s32.totalorder %s36, %s39
      %p48 = scmp.eq.s32.totalorder %s31, 1
      %p49 = por %p47, %p48
      %p50 = scmp.ne.s32.totalorder %s39, %s40
      %p51 = scmp.eq.s32.totalorder %s31, 0
      %p52 = por %p50, %p51
      %p53 = scmp.ne.s32.totalorder %s39, %s40
      %p54 = scmp.eq.s32.totalorder %s32, 1
      %p55 = por %p53, %p54
      %p57 = scmp.ne.s32.totalorder %s40, %s56
      %p58 = scmp.eq.s32.totalorder %s32, 0
      %p59 = por %p57, %p58
      %s60 = ssub.s32 %s26, %s33
      %p61 = scmp.eq.s32.totalorder %s60, 0
      %s63 = sadd.s32 %s62, 1
      %s64 = scalar_select %p61, %s62, %s63
      %p67 = pneg %p61
      %p68 = scmp.eq.s32.totalorder %s26, 1
      %p69 = por %p67, %p68
      %p70 = scmp.ne.s32.totalorder %s62, %s65
      %p71 = scmp.eq.s32.totalorder %s26, 0
      %p72 = por %p70, %p71
      %p73 = scmp.ne.s32.totalorder %s62, %s65
      %p74 = scmp.eq.s32.totalorder %s31, 1
      %p75 = por %p73, %p74
      %p76 = scmp.ne.s32.totalorder %s65, %s66
      %p77 = scmp.eq.s32.totalorder %s31, 0
      %p78 = por %p76, %p77
      %p79 = scmp.ne.s32.totalorder %s65, %s66
      %p80 = scmp.eq.s32.totalorder %s32, 1
      %p81 = por %p79, %p80
      %p83 = scmp.ne.s32.totalorder %s66, %s82
      %p84 = scmp.eq.s32.totalorder %s32, 0
      %p85 = por %p83, %p84
      %s87 = sadd.s32 %s86, 1
      %p90 = scmp.eq.s32.totalorder %s26, 1
      %p91 = scmp.ne.s32.totalorder %s86, %s88
      %p92 = scmp.eq.s32.totalorder %s26, 0
      %p93 = por %p91, %p92
      %p94 = scmp.ne.s32.totalorder %s86, %s88
      %p95 = scmp.eq.s32.totalorder %s31, 1
      %p96 = por %p94, %p95
      %p97 = scmp.ne.s32.totalorder %s88, %s89
      %p98 = scmp.eq.s32.totalorder %s31, 0
      %p99 = por %p97, %p98
      %p100 = scmp.ne.s32.totalorder %s88, %s89
      %p101 = scmp.eq.s32.totalorder %s32, 1
      %p102 = por %p100, %p101
      %p104 = scmp.ne.s32.totalorder %s89, %s103
      %p105 = scmp.eq.s32.totalorder %s32, 0
      %p106 = por %p104, %p105
      %s108 = sadd.s32 %s107, 1
      %p111 = scmp.eq.s32.totalorder %s26, 1
      %p112 = scmp.ne.s32.totalorder %s107, %s109
      %p113 = scmp.eq.s32.totalorder %s26, 0
      %p114 = por %p112, %p113
      %p115 = scmp.ne.s32.totalorder %s107, %s109
      %p116 = scmp.eq.s32.totalorder %s31, 1
      %p117 = por %p115, %p116
      %p118 = scmp.ne.s32.totalorder %s109, %s110
      %p119 = scmp.eq.s32.totalorder %s31, 0
      %p120 = por %p118, %p119
      %p121 = scmp.ne.s32.totalorder %s109, %s110
      %p122 = scmp.eq.s32.totalorder %s32, 1
      %p123 = por %p121, %p122
      %p125 = scmp.ne.s32.totalorder %s110, %s124
      %p126 = scmp.eq.s32.totalorder %s32, 0
      %p127 = por %p125, %p126
      %s129 = sadd.s32 %s128, 1
      %p132 = scmp.eq.s32.totalorder %s26, 1
      %p133 = scmp.ne.s32.totalorder %s128, %s130
      %p134 = scmp.eq.s32.totalorder %s26, 0
      %p135 = por %p133, %p134
      %p136 = scmp.ne.s32.totalorder %s128, %s130
      %p137 = scmp.eq.s32.totalorder %s31, 1
      %p138 = por %p136, %p137
      %p139 = scmp.ne.s32.totalorder %s130, %s131
      %p140 = scmp.eq.s32.totalorder %s31, 0
      %p141 = por %p139, %p140
      %p142 = scmp.ne.s32.totalorder %s130, %s131
      %p143 = scmp.eq.s32.totalorder %s32, 1
      %p144 = por %p142, %p143
      %p146 = scmp.ne.s32.totalorder %s131, %s145
      %p147 = scmp.eq.s32.totalorder %s32, 0
      %p148 = por %p146, %p147
      %s150 = sadd.s32 %s149, 1
      %p153 = scmp.eq.s32.totalorder %s26, 1
      %p154 = scmp.ne.s32.totalorder %s149, %s151
      %p155 = scmp.eq.s32.totalorder %s26, 0
      %p156 = por %p154, %p155
      %p157 = scmp.ne.s32.totalorder %s149, %s151
      %p158 = scmp.eq.s32.totalorder %s31, 1
      %p159 = por %p157, %p158
      %p160 = scmp.ne.s32.totalorder %s151, %s152
      %p161 = scmp.eq.s32.totalorder %s31, 0
      %p162 = por %p160, %p161
      %p163 = scmp.ne.s32.totalorder %s151, %s152
      %p164 = scmp.eq.s32.totalorder %s32, 1
      %p165 = por %p163, %p164
      %p167 = scmp.ne.s32.totalorder %s152, %s166
      %p168 = scmp.eq.s32.totalorder %s32, 0
      %p169 = por %p167, %p168
      %s171 = sadd.s32 %s170, 1
      %p174 = scmp.eq.s32.totalorder %s26, 1
      %p175 = scmp.ne.s32.totalorder %s170, %s172
      %p176 = scmp.eq.s32.totalorder %s26, 0
      %p177 = por %p175, %p176
      %p178 = scmp.ne.s32.totalorder %s170, %s172
      %p179 = scmp.eq.s32.totalorder %s31, 1
      %p180 = por %p178, %p179
      %p181 = scmp.ne.s32.totalorder %s172, %s173
      %p182 = scmp.eq.s32.totalorder %s31, 0
      %p183 = por %p181, %p182
      %p184 = scmp.ne.s32.totalorder %s172, %s173
      %p185 = scmp.eq.s32.totalorder %s32, 1
      %p186 = por %p184, %p185
      %p188 = scmp.ne.s32.totalorder %s173, %s187
      %p189 = scmp.eq.s32.totalorder %s32, 0
      %p190 = por %p188, %p189
      %s192 = sadd.s32 %s191, 1
      %p195 = scmp.eq.s32.totalorder %s26, 1
      %p196 = scmp.ne.s32.totalorder %s191, %s193
      %p197 = scmp.eq.s32.totalorder %s26, 0
      %p198 = por %p196, %p197
      %p199 = scmp.ne.s32.totalorder %s191, %s193
      %p200 = scmp.eq.s32.totalorder %s31, 1
      %p201 = por %p199, %p200
      %p202 = scmp.ne.s32.totalorder %s193, %s194
      %p203 = scmp.eq.s32.totalorder %s31, 0
      %p204 = por %p202, %p203
      %p205 = scmp.ne.s32.totalorder %s193, %s194
      %p206 = scmp.eq.s32.totalorder %s32, 1
      %p207 = por %p205, %p206
      %p209 = scmp.ne.s32.totalorder %s194, %s208
      %p210 = scmp.eq.s32.totalorder %s32, 0
      %p211 = por %p209, %p210
      %s213 = sadd.s32 %s212, 1
      %p216 = scmp.eq.s32.totalorder %s26, 1
      %p217 = scmp.ne.s32.totalorder %s212, %s214
      %p218 = scmp.eq.s32.totalorder %s26, 0
      %p219 = por %p217, %p218
      %p220 = scmp.ne.s32.totalorder %s212, %s214
      %p221 = scmp.eq.s32.totalorder %s31, 1
      %p222 = por %p220, %p221
      %p223 = scmp.ne.s32.totalorder %s214, %s215
      %p224 = scmp.eq.s32.totalorder %s31, 0
      %p225 = por %p223, %p224
      %p226 = scmp.ne.s32.totalorder %s214, %s215
      %p227 = scmp.eq.s32.totalorder %s32, 1
      %p228 = por %p226, %p227
      %p230 = scmp.ne.s32.totalorder %s215, %s229
      %p231 = scmp.eq.s32.totalorder %s32, 0
      %p232 = por %p230, %p231
      %s234 = sadd.s32 %s233, 1
      %p237 = scmp.eq.s32.totalorder %s26, 1
      %p238 = scmp.ne.s32.totalorder %s233, %s235
      %p239 = scmp.eq.s32.totalorder %s26, 0
      %p240 = por %p238, %p239
      %p241 = scmp.ne.s32.totalorder %s233, %s235
      %p242 = scmp.eq.s32.totalorder %s31, 1
      %p243 = por %p241, %p242
      %p244 = scmp.ne.s32.totalorder %s235, %s236
      %p245 = scmp.eq.s32.totalorder %s31, 0
      %p246 = por %p244, %p245
      %p247 = scmp.ne.s32.totalorder %s235, %s236
      %p248 = scmp.eq.s32.totalorder %s32, 1
      %p249 = por %p247, %p248
      %p251 = scmp.ne.s32.totalorder %s236, %s250
      %p252 = scmp.eq.s32.totalorder %s32, 0
      %p253 = por %p251, %p252
      %s255 = sadd.s32 %s254, 1
      %p258 = scmp.eq.s32.totalorder %s26, 1
      %p259 = scmp.ne.s32.totalorder %s254, %s256
      %p260 = scmp.eq.s32.totalorder %s26, 0
      %p261 = por %p259, %p260
      %p262 = scmp.ne.s32.totalorder %s254, %s256
      %p263 = scmp.eq.s32.totalorder %s31, 1
      %p264 = por %p262, %p263
      %p265 = scmp.ne.s32.totalorder %s256, %s257
      %p266 = scmp.eq.s32.totalorder %s31, 0
      %p267 = por %p265, %p266
      %p268 = scmp.ne.s32.totalorder %s256, %s257
      %p269 = scmp.eq.s32.totalorder %s32, 1
      %p270 = por %p268, %p269
      %p272 = scmp.ne.s32.totalorder %s257, %s271
      %p273 = scmp.eq.s32.totalorder %s32, 0
      %p274 = por %p272, %p273
      %s276 = sadd.s32 %s275, 1
      %p279 = scmp.eq.s32.totalorder %s26, 1
      %p280 = scmp.ne.s32.totalorder %s275, %s277
      %p281 = scmp.eq.s32.totalorder %s26, 0
      %p282 = por %p280, %p281
      %p283 = scmp.ne.s32.totalorder %s275, %s277
      %p284 = scmp.eq.s32.totalorder %s31, 1
      %p285 = por %p283, %p284
      %p286 = scmp.ne.s32.totalorder %s277, %s278
      %p287 = scmp.eq.s32.totalorder %s31, 0
      %p288 = por %p286, %p287
      %p289 = scmp.ne.s32.totalorder %s277, %s278
      %p290 = scmp.eq.s32.totalorder %s32, 1
      %p291 = por %p289, %p290
      %p293 = scmp.ne.s32.totalorder %s278, %s292
      %p294 = scmp.eq.s32.totalorder %s32, 0
      %p295 = por %p293, %p294
      %s297 = sadd.s32 %s296, 1
      %p300 = scmp.eq.s32.totalorder %s26, 1
      %p301 = scmp.ne.s32.totalorder %s296, %s298
      %p302 = scmp.eq.s32.totalorder %s26, 0
      %p303 = por %p301, %p302
      %p304 = scmp.ne.s32.totalorder %s296, %s298
      %p305 = scmp.eq.s32.totalorder %s31, 1
      %p306 = por %p304, %p305
      %p307 = scmp.ne.s32.totalorder %s298, %s299
      %p308 = scmp.eq.s32.totalorder %s31, 0
      %p309 = por %p307, %p308
      %p310 = scmp.ne.s32.totalorder %s298, %s299
      %p311 = scmp.eq.s32.totalorder %s32, 1
      %p312 = por %p310, %p311
      %p314 = scmp.ne.s32.totalorder %s299, %s313
      %p315 = scmp.eq.s32.totalorder %s32, 0
      %p316 = por %p314, %p315
      %s318 = sadd.s32 %s317, 1
      %p321 = scmp.eq.s32.totalorder %s26, 1
      %p322 = scmp.ne.s32.totalorder %s317, %s319
      %p323 = scmp.eq.s32.totalorder %s26, 0
      %p324 = por %p322, %p323
      %p325 = scmp.ne.s32.totalorder %s317, %s319
      %p326 = scmp.eq.s32.totalorder %s31, 1
      %p327 = por %p325, %p326
      %p328 = scmp.ne.s32.totalorder %s319, %s320
      %p329 = scmp.eq.s32.totalorder %s31, 0
      %p330 = por %p328, %p329
      %p331 = scmp.ne.s32.totalorder %s319, %s320
      %p332 = scmp.eq.s32.totalorder %s32, 1
      %p333 = por %p331, %p332
      %p335 = scmp.ne.s32.totalorder %s320, %s334
      %p336 = scmp.eq.s32.totalorder %s32, 0
      %p337 = por %p335, %p336
      %s338 = ssub.s32 %s26, %s33
      %p339 = scmp.eq.s32.totalorder %s338, 0
      %s341 = sadd.s32 %s340, 1
      %s342 = scalar_select %p339, %s340, %s341
      %p345 = pneg %p339
      %p346 = scmp.eq.s32.totalorder %s26, 1
      %p347 = por %p345, %p346
      %p348 = scmp.ne.s32.totalorder %s340, %s343
      %p349 = scmp.eq.s32.totalorder %s26, 0
      %p350 = por %p348, %p349
      %p351 = scmp.ne.s32.totalorder %s340, %s343
      %p352 = scmp.eq.s32.totalorder %s31, 1
      %p353 = por %p351, %p352
      %p354 = scmp.ne.s32.totalorder %s343, %s344
      %p355 = scmp.eq.s32.totalorder %s31, 0
      %p356 = por %p354, %p355
      %p357 = scmp.ne.s32.totalorder %s343, %s344
      %p358 = scmp.eq.s32.totalorder %s32, 1
      %p359 = por %p357, %p358
      %p361 = scmp.ne.s32.totalorder %s344, %s360
      %p362 = scmp.eq.s32.totalorder %s32, 0
      %p363 = por %p361, %p362
      %p364 = scmp.le.s32.totalorder 1, %s26
      %p365 = scmp.lt.s32.totalorder %s26, 3
      %p366 = pnand %p364, %p365
      %p367 = pneg %p366
      // Predicated region
      $region9: #{tpu_custom_call.1} parent=5 // pred_check
        _
      $region10: #{tpu_custom_call.1} parent=5 // pred_check_branch
        %369 = sbr.rel (%p366) target = $region12
      $region11: #{tpu_custom_call.1} parent=5 // pred_region
        %s370 = ssub.s32 %s26, 1
        // Predicated region
        $region13: #{tpu_custom_call.1} parent=11 // pred_check
          %p371 = pneg %p99
        $region14: #{tpu_custom_call.1} parent=11 // pred_check_branch
          %373 = sbr.rel (%p371) target = $region16
        $region15: #{tpu_custom_call.1} parent=11 // pred_region
          %s375 = ssub.s32 128, 128
          %376 = vsyncadd [#allocation3], %s375
          %s378 = sshll.u32 [#allocation2], 4
          %s379 = int_to_ptr.vmem [resolvable:$true] %s378
          %381 = dma.hbm_to_vmem [thread:$0]  %s2, 128, %s379, [#allocation3]
        $region16: #{tpu_custom_call.1} parent=11 // pred_fallthru
          _
        // Predicated region
        $region17: #{tpu_custom_call.1} parent=11 // pred_check
          %p382 = pneg %p120
        $region18: #{tpu_custom_call.1} parent=11 // pred_check_branch
          %384 = sbr.rel (%p382) target = $region20
        $region19: #{tpu_custom_call.1} parent=11 // pred_region
          %s386 = ssub.s32 256, 256
          %387 = vsyncadd [#allocation6], %s386
          %s388 = sshll.u32 [#allocation5], 4
          %s389 = int_to_ptr.vmem [resolvable:$true] %s388
          %394 = dma.hbm_to_vmem [thread:$0]  %s3, 256, %s389, [#allocation6], 128, 128, 8
        $region20: #{tpu_custom_call.1} parent=11 // pred_fallthru
          _
        // Predicated region
        $region21: #{tpu_custom_call.1} parent=11 // pred_check
          %p395 = pneg %p141
        $region22: #{tpu_custom_call.1} parent=11 // pred_check_branch
          %397 = sbr.rel (%p395) target = $region24
        $region23: #{tpu_custom_call.1} parent=11 // pred_region
          _
        $region24: #{tpu_custom_call.1} parent=11 // pred_fallthru
          _
        // Predicated region
        $region25: #{tpu_custom_call.1} parent=11 // pred_check
          %p398 = pneg %p162
        $region26: #{tpu_custom_call.1} parent=11 // pred_check_branch
          %400 = sbr.rel (%p398) target = $region28
        $region27: #{tpu_custom_call.1} parent=11 // pred_region
          %s402 = ssub.s32 256, 256
          %403 = vsyncadd [#allocation6], %s402
          %s404 = sshll.u32 [#allocation7], 4
          %s405 = int_to_ptr.vmem [resolvable:$true] %s404
          %410 = dma.hbm_to_vmem [thread:$0]  %s5, 256, %s405, [#allocation6], 128, 128, 8
        $region28: #{tpu_custom_call.1} parent=11 // pred_fallthru
          _
        // Predicated region
        $region29: #{tpu_custom_call.1} parent=11 // pred_check
          %p411 = pneg %p183
        $region30: #{tpu_custom_call.1} parent=11 // pred_check_branch
          %413 = sbr.rel (%p411) target = $region32
        $region31: #{tpu_custom_call.1} parent=11 // pred_region
          _
        $region32: #{tpu_custom_call.1} parent=11 // pred_fallthru
          _
        // Predicated region
        $region33: #{tpu_custom_call.1} parent=11 // pred_check
          %p414 = pneg %p204
        $region34: #{tpu_custom_call.1} parent=11 // pred_check_branch
          %416 = sbr.rel (%p414) target = $region36
        $region35: #{tpu_custom_call.1} parent=11 // pred_region
          _
        $region36: #{tpu_custom_call.1} parent=11 // pred_fallthru
          _
        // Predicated region
        $region37: #{tpu_custom_call.1} parent=11 // pred_check
          %p417 = pneg %p225
        $region38: #{tpu_custom_call.1} parent=11 // pred_check_branch
          %419 = sbr.rel (%p417) target = $region40
        $region39: #{tpu_custom_call.1} parent=11 // pred_region
          %s421 = ssub.s32 256, 256
          %422 = vsyncadd [#allocation9], %s421
          %s423 = sshll.u32 [#allocation8], 4
          %s424 = int_to_ptr.vmem [resolvable:$true] %s423
          %429 = dma.hbm_to_vmem [thread:$0]  %s8, 256, %s424, [#allocation9], 128, 128, 8
        $region40: #{tpu_custom_call.1} parent=11 // pred_fallthru
          _
        // Predicated region
        $region41: #{tpu_custom_call.1} parent=11 // pred_check
          %p430 = pneg %p246
        $region42: #{tpu_custom_call.1} parent=11 // pred_check_branch
          %432 = sbr.rel (%p430) target = $region44
        $region43: #{tpu_custom_call.1} parent=11 // pred_region
          _
        $region44: #{tpu_custom_call.1} parent=11 // pred_fallthru
          _
        // Predicated region
        $region45: #{tpu_custom_call.1} parent=11 // pred_check
          %p433 = pneg %p267
        $region46: #{tpu_custom_call.1} parent=11 // pred_check_branch
          %435 = sbr.rel (%p433) target = $region48
        $region47: #{tpu_custom_call.1} parent=11 // pred_region
          _
        $region48: #{tpu_custom_call.1} parent=11 // pred_fallthru
          _
        // Predicated region
        $region49: #{tpu_custom_call.1} parent=11 // pred_check
          %p436 = pneg %p288
        $region50: #{tpu_custom_call.1} parent=11 // pred_check_branch
          %438 = sbr.rel (%p436) target = $region52
        $region51: #{tpu_custom_call.1} parent=11 // pred_region
          _
        $region52: #{tpu_custom_call.1} parent=11 // pred_fallthru
          _
        // Predicated region
        $region53: #{tpu_custom_call.1} parent=11 // pred_check
          %p439 = pneg %p309
        $region54: #{tpu_custom_call.1} parent=11 // pred_check_branch
          %441 = sbr.rel (%p439) target = $region56
        $region55: #{tpu_custom_call.1} parent=11 // pred_region
          _
        $region56: #{tpu_custom_call.1} parent=11 // pred_fallthru
          _
        // Predicated region
        $region57: #{tpu_custom_call.1} parent=11 // pred_check
          %p442 = pneg %p330
        $region58: #{tpu_custom_call.1} parent=11 // pred_check_branch
          %444 = sbr.rel (%p442) target = $region60
        $region59: #{tpu_custom_call.1} parent=11 // pred_region
          _
        $region60: #{tpu_custom_call.1} parent=11 // pred_fallthru
          _
      $region12: #{tpu_custom_call.1} parent=5 // pred_fallthru
        _
      %p445 = scmp.lt.s32.totalorder %s26, 2
      // Predicated region
      $region61: #{tpu_custom_call.1} parent=5 // pred_check
        %p446 = pneg %p445
      $region62: #{tpu_custom_call.1} parent=5 // pred_check_branch
        %448 = sbr.rel (%p446) target = $region64
      $region63: #{tpu_custom_call.1} parent=5 // pred_region
        // Predicated region
        $region65: #{tpu_custom_call.1} parent=63 // pred_check
          %p449 = pneg %p46
        $region66: #{tpu_custom_call.1} parent=63 // pred_check_branch
          %451 = sbr.rel (%p449) target = $region68
        $region67: #{tpu_custom_call.1} parent=63 // pred_region
          %p452 = scmp.lt.s32.totalorder %s26, 1
          %s453 = scalar_select %p452, %s26, 1
          %s454 = smul.addr %s453, 2
          %s455 = smul.addr %s454, 8
          %s456 = scalar_lea.vmem %s0, %s455
        $region68: #{tpu_custom_call.1} parent=63 // pred_fallthru
          _
        // Predicated region
        $region69: #{tpu_custom_call.1} parent=63 // pred_check
          %p457 = pneg %p72
        $region70: #{tpu_custom_call.1} parent=63 // pred_check_branch
          %459 = sbr.rel (%p457) target = $region72
        $region71: #{tpu_custom_call.1} parent=63 // pred_region
          %p460 = scmp.lt.s32.totalorder %s26, 1
          %s461 = scalar_select %p460, %s26, 1
          %s462 = smul.addr %s461, 4
          %s463 = smul.addr %s462, 4
          %s464 = scalar_lea.vmem %s1, %s463
        $region72: #{tpu_custom_call.1} parent=63 // pred_fallthru
          _
      $region64: #{tpu_custom_call.1} parent=5 // pred_fallthru
        _
      %p465 = scmp.le.s32.totalorder 1, %s26
      %p466 = scmp.lt.s32.totalorder %s26, 3
      %p467 = pnand %p465, %p466
      %p468 = pneg %p467
      // Predicated region
      $region73: #{tpu_custom_call.1} parent=5 // pred_check
        _
      $region74: #{tpu_custom_call.1} parent=5 // pred_check_branch
        %470 = sbr.rel (%p467) target = $region76
      $region75: #{tpu_custom_call.1} parent=5 // pred_region
        %s471 = ssub.s32 %s26, 1
        // Predicated region
        $region77: #{tpu_custom_call.1} parent=75 // pred_check
          %p472 = pneg %p99
        $region78: #{tpu_custom_call.1} parent=75 // pred_check_branch
          %474 = sbr.rel (%p472) target = $region80
        $region79: #{tpu_custom_call.1} parent=75 // pred_region
          %475 = dma.done [#allocation3], 128
        $region80: #{tpu_custom_call.1} parent=75 // pred_fallthru
          _
        // Predicated region
        $region81: #{tpu_custom_call.1} parent=75 // pred_check
          %p476 = pneg %p120
        $region82: #{tpu_custom_call.1} parent=75 // pred_check_branch
          %478 = sbr.rel (%p476) target = $region84
        $region83: #{tpu_custom_call.1} parent=75 // pred_region
          %479 = dma.done [#allocation6], 256
        $region84: #{tpu_custom_call.1} parent=75 // pred_fallthru
          _
        // Predicated region
        $region85: #{tpu_custom_call.1} parent=75 // pred_check
          %p480 = pneg %p162
        $region86: #{tpu_custom_call.1} parent=75 // pred_check_branch
          %482 = sbr.rel (%p480) target = $region88
        $region87: #{tpu_custom_call.1} parent=75 // pred_region
          %483 = dma.done [#allocation6], 256
        $region88: #{tpu_custom_call.1} parent=75 // pred_fallthru
          _
        // Predicated region
        $region89: #{tpu_custom_call.1} parent=75 // pred_check
          %p484 = pneg %p225
        $region90: #{tpu_custom_call.1} parent=75 // pred_check_branch
          %486 = sbr.rel (%p484) target = $region92
        $region91: #{tpu_custom_call.1} parent=75 // pred_region
          %487 = dma.done [#allocation9], 256
        $region92: #{tpu_custom_call.1} parent=75 // pred_fallthru
          _
        %p488 = scmp.lt.s32.totalorder %s31, 1
        %s489 = scalar_select %p488, %s31, 1
        %s490 = smul.addr %s489, 2
        %s491 = smul.addr %s490, 8
        %s492 = scalar_lea.vmem %s0, %s491
        %p493 = pneg %p52
        %p494 = pneg %p49
        %p495 = scmp.lt.s32.totalorder %s31, 1
        %s496 = scalar_select %p495, %s31, 1
        %s497 = smul.addr %s496, 4
        %s498 = smul.addr %s497, 4
        %s499 = scalar_lea.vmem %s1, %s498
        %p500 = pneg %p78
        %p501 = pneg %p75
        %p502 = pneg %p99
        %p503 = pneg %p96
        %p504 = pneg %p120
        %p505 = pneg %p117
        %p506 = pneg %p141
        %p507 = pneg %p138
        %p508 = pneg %p162
        %p509 = pneg %p159
        %p510 = pneg %p183
        %p511 = pneg %p180
        %p512 = pneg %p204
        %p513 = pneg %p201
        %p514 = pneg %p225
        %p515 = pneg %p222
        %p516 = pneg %p246
        %p517 = pneg %p243
        %p518 = pneg %p267
        %p519 = pneg %p264
        %p520 = pneg %p288
        %p521 = pneg %p285
        %p522 = pneg %p309
        %p523 = pneg %p306
        %p524 = pneg %p330
        %p525 = pneg %p327
        %p526 = pneg %p356
        %p527 = pneg %p353
        %s528 = sand.u32 %s343, 1
        %s529 = scalar_lea.sflag [#allocation4], %s528
        %s530 = sand.u32 %s343, 1
        %s531 = smul.addr %s530, 16
        %s532 = scalar_lea.vmem [#allocation10], %s531
        %p533 = scmp.lt.s32.totalorder %s31, 1
        %s534 = scalar_select %p533, %s31, 1
        %s535 = smul.addr %s534, 2
        %s536 = smul.addr %s535, 8
        %s537 = scalar_lea.vmem %s0, %s536
        %p538 = scmp.lt.s32.totalorder %s31, 1
        %s539 = scalar_select %p538, %s31, 1
        %s540 = smul.addr %s539, 4
        %s541 = smul.addr %s540, 4
        %s542 = scalar_lea.vmem %s1, %s541
        %v543 = vld [vmem:[%s542] sm:$0xf]
        %v544 = vld [vmem:[%s542 + $0x4] sm:$0xf]
        %v545 = vld [vmem:[%s542 + $0x8] sm:$0xf]
        %v546 = vld [vmem:[%s542 + $0xc] sm:$0xf]
        %v547 = vunpack.c.l.bf16 %v543
        %v548 = vunpack.c.l.bf16 %v544
        %v549 = vunpack.c.l.bf16 %v545
        %v550 = vunpack.c.l.bf16 %v546
        %v551 = vld [vmem:[%s537] sm:$0xff]
        %v552 = vld [vmem:[%s537 + $0x8] sm:$0xff]
        %v553 = vld [vmem:[#allocation2] sm:$0xff]
        %v554 = vld [vmem:[#allocation5] sm:$0xff]
        %v555 = vld [vmem:[#allocation5 + $0x8] sm:$0xff]
        %v556 = vld [vmem:[%s4] sm:$0x1]
        %vm557 = vcmask 130048
        %v559 = vsel %vm557, %v547, 0
        %v562 = vsel %vm557, %v548, 0
        %v565 = vsel %vm557, %v549, 0
        %v568 = vsel %vm557, %v550, 0
        %570 = vmatprep.subr.mxu0 0.0
        %571 = vmatpush1.msra.mxu0 %v551
        %572 = vmatprep.subr.mxu0 0.0
        %573 = vmatpush1.msra.mxu0 %v552
        %574 = vmatprep.subr.mxu0 0.0
        %575 = vmatpush1.msra.mxu0 0.0
        %576 = vmatprep.subr.mxu0 0.0
        %577 = vmatpush1.msra.mxu0 0.0
        %578 = vmatprep.subr.mxu0 0.0
        %579 = vmatpush1.msra.mxu0 0.0
        %580 = vmatprep.subr.mxu0 0.0
        %581 = vmatpush1.msra.mxu0 0.0
        %582 = vmatprep.subr.mxu0 0.0
        %583 = vmatpush1.msra.mxu0 0.0
        %584 = vmatprep.subr.mxu0 0.0
        %585 = vmatpush1.msra.mxu0 0.0
        %586 = vmatprep.subr.mxu0 0.0
        %587 = vmatpush1.msra.mxu0 0.0
        %588 = vmatprep.subr.mxu0 0.0
        %589 = vmatpush1.msra.mxu0 0.0
        %590 = vmatprep.subr.mxu0 0.0
        %591 = vmatpush1.msra.mxu0 0.0
        %592 = vmatprep.subr.mxu0 0.0
        %593 = vmatpush1.msra.mxu0 0.0
        %594 = vmatprep.subr.mxu0 0.0
        %595 = vmatpush1.msra.mxu0 0.0
        %596 = vmatprep.subr.mxu0 0.0
        %597 = vmatpush1.msra.mxu0 0.0
        %598 = vmatprep.subr.mxu0 0.0
        %599 = vmatpush1.msra.mxu0 0.0
        %600 = vmatprep.subr.mxu0 0.0
        %601 = vmatpush1.msra.mxu0 0.0
        %602 = vmatprep.subr.mxu0 0.0
        %603 = vmatpush1.msra.mxu0 0.0
        %604 = vmatprep.subr.mxu0 0.0
        %605 = vmatpush1.msra.mxu0 0.0
        %606 = vmatprep.subr.mxu0 0.0
        %607 = vmatpush1.msra.mxu0 0.0
        %608 = vmatprep.subr.mxu0 0.0
        %609 = vmatpush1.msra.mxu0 0.0
        %610 = vmatprep.subr.mxu0 0.0
        %611 = vmatpush1.msra.mxu0 0.0
        %612 = vmatprep.subr.mxu0 0.0
        %613 = vmatpush1.msra.mxu0 0.0
        %614 = vmatprep.subr.mxu0 0.0
        %615 = vmatpush1.msra.mxu0 0.0
        %616 = vmatprep.subr.mxu0 0.0
        %617 = vmatpush1.msra.mxu0 0.0
        %618 = vmatprep.subr.mxu0 0.0
        %619 = vmatpush1.msra.mxu0 0.0
        %620 = vmatprep.subr.mxu0 0.0
        %621 = vmatpush1.msra.mxu0 0.0
        %622 = vmatprep.subr.mxu0 0.0
        %623 = vmatpush1.msra.mxu0 0.0
        %624 = vmatprep.subr.mxu0 0.0
        %625 = vmatpush1.msra.mxu0 0.0
        %626 = vmatprep.subr.mxu0 0.0
        %627 = vmatpush1.msra.mxu0 0.0
        %628 = vmatprep.subr.mxu0 0.0
        %629 = vmatpush1.msra.mxu0 0.0
        %630 = vmatprep.subr.mxu0 0.0
        %631 = vmatpush1.msra.mxu0 0.0
        %632 = vmatprep.subr.mxu0 0.0
        %633 = vmatpush1.msra.mxu0 0.0
        %634 = vmatprep.mubr.f32.mxu0 0.0
        %635 = vmatmul.mubr.f32.gmra.mrb[0].mxu0 %v559
        %v636 = vpop.f32.mrb[0].mxu0
        %v637 = vadd.f32 0.0, %v636
        %v638 = vpop.f32.mrb[0].mxu0
        %639 = vmatprep.mubr.f32.mxu0 0.0
        %640 = vmatmul.mubr.f32.gmra.mrb[0].mxu0 %v562
        %v641 = vpop.f32.mrb[0].mxu0
        %v642 = vadd.f32 0.0, %v641
        %v643 = vpop.f32.mrb[0].mxu0
        %644 = vmatprep.mubr.f32.mxu0 0.0
        %645 = vmatmul.mubr.f32.gmra.mrb[0].mxu0 %v565
        %v646 = vpop.f32.mrb[0].mxu0
        %v647 = vadd.f32 0.0, %v646
        %v648 = vpop.f32.mrb[0].mxu0
        %649 = vmatprep.mubr.f32.mxu0 0.0
        %650 = vmatmul.mubr.f32.gmra.mrb[0].mxu0 %v568
        %v651 = vpop.f32.mrb[0].mxu0
        %v652 = vadd.f32 0.0, %v651
        %v653 = vpop.f32.mrb[0].mxu0
        %654 = vdwg.mxu0
        %v656 = vlaneseq
        %v657 = vshrl.u32 %v656, 7
        %v658 = vsub.s32 0, %v657
        %v659 = vrot.slane %v556, %v658
        %vm661 = vcmask 64512
        %v663 = vsel %vm661, %v551, 0
        %v666 = vsel %vm661, %v552, 0
        %668 = vmatprep.subr.mxu0 0.0
        %669 = vmatpush1.msra.mxu0 %v553
        %670 = vmatprep.subr.mxu0 0.0
        %671 = vmatpush1.msra.mxu0 0.0
        %672 = vmatprep.subr.mxu0 0.0
        %673 = vmatpush1.msra.mxu0 0.0
        %674 = vmatprep.subr.mxu0 0.0
        %675 = vmatpush1.msra.mxu0 0.0
        %676 = vmatprep.subr.mxu0 0.0
        %677 = vmatpush1.msra.mxu0 0.0
        %678 = vmatprep.subr.mxu0 0.0
        %679 = vmatpush1.msra.mxu0 0.0
        %680 = vmatprep.subr.mxu0 0.0
        %681 = vmatpush1.msra.mxu0 0.0
        %682 = vmatprep.subr.mxu0 0.0
        %683 = vmatpush1.msra.mxu0 0.0
        %684 = vmatprep.subr.mxu0 0.0
        %685 = vmatpush1.msra.mxu0 0.0
        %686 = vmatprep.subr.mxu0 0.0
        %687 = vmatpush1.msra.mxu0 0.0
        %688 = vmatprep.subr.mxu0 0.0
        %689 = vmatpush1.msra.mxu0 0.0
        %690 = vmatprep.subr.mxu0 0.0
        %691 = vmatpush1.msra.mxu0 0.0
        %692 = vmatprep.subr.mxu0 0.0
        %693 = vmatpush1.msra.mxu0 0.0
        %694 = vmatprep.subr.mxu0 0.0
        %695 = vmatpush1.msra.mxu0 0.0
        %696 = vmatprep.subr.mxu0 0.0
        %697 = vmatpush1.msra.mxu0 0.0
        %698 = vmatprep.subr.mxu0 0.0
        %699 = vmatpush1.msra.mxu0 0.0
        %700 = vmatprep.subr.mxu0 0.0
        %701 = vmatpush1.msra.mxu0 0.0
        %702 = vmatprep.subr.mxu0 0.0
        %703 = vmatpush1.msra.mxu0 0.0
        %704 = vmatprep.subr.mxu0 0.0
        %705 = vmatpush1.msra.mxu0 0.0
        %706 = vmatprep.subr.mxu0 0.0
        %707 = vmatpush1.msra.mxu0 0.0
        %708 = vmatprep.subr.mxu0 0.0
        %709 = vmatpush1.msra.mxu0 0.0
        %710 = vmatprep.subr.mxu0 0.0
        %711 = vmatpush1.msra.mxu0 0.0
        %712 = vmatprep.subr.mxu0 0.0
        %713 = vmatpush1.msra.mxu0 0.0
        %714 = vmatprep.subr.mxu0 0.0
        %715 = vmatpush1.msra.mxu0 0.0
        %716 = vmatprep.subr.mxu0 0.0
        %717 = vmatpush1.msra.mxu0 0.0
        %718 = vmatprep.subr.mxu0 0.0
        %719 = vmatpush1.msra.mxu0 0.0
        %720 = vmatprep.subr.mxu0 0.0
        %721 = vmatpush1.msra.mxu0 0.0
        %722 = vmatprep.subr.mxu0 0.0
        %723 = vmatpush1.msra.mxu0 0.0
        %724 = vmatprep.subr.mxu0 0.0
        %725 = vmatpush1.msra.mxu0 0.0
        %726 = vmatprep.subr.mxu0 0.0
        %727 = vmatpush1.msra.mxu0 0.0
        %728 = vmatprep.subr.mxu0 0.0
        %729 = vmatpush1.msra.mxu0 0.0
        %730 = vmatprep.subr.mxu0 0.0
        %731 = vmatpush1.msra.mxu0 0.0
        %732 = vmatprep.mubr.f32.mxu0 0.0
        %733 = vmatmul.mubr.f32.gmra.mrb[0].mxu0 %v663
        %v734 = vpop.f32.mrb[0].mxu0
        %v735 = vadd.f32 %v659, %v734
        %v736 = vpop.f32.mrb[0].mxu0
        %737 = vmatprep.mubr.f32.mxu0 0.0
        %738 = vmatmul.mubr.f32.gmra.mrb[0].mxu0 %v666
        %v739 = vpop.f32.mrb[0].mxu0
        %v740 = vadd.f32 %v659, %v739
        %v741 = vpop.f32.mrb[0].mxu0
        %742 = vdwg.mxu0
        %v744 = vsel %vm661, %v637, 0
        %v747 = vsel %vm661, %v642, 0
        %749 = vmatprep.subr.mxu0 0.0
        %750 = vmatpush1.msra.mxu0 %v554
        %751 = vmatprep.subr.mxu0 0.0
        %752 = vmatpush1.msra.mxu0 0.0
        %753 = vmatprep.subr.mxu0 0.0
        %754 = vmatpush1.msra.mxu0 0.0
        %755 = vmatprep.subr.mxu0 0.0
        %756 = vmatpush1.msra.mxu0 0.0
        %757 = vmatprep.subr.mxu0 0.0
        %758 = vmatpush1.msra.mxu0 0.0
        %759 = vmatprep.subr.mxu0 0.0
        %760 = vmatpush1.msra.mxu0 0.0
        %761 = vmatprep.subr.mxu0 0.0
        %762 = vmatpush1.msra.mxu0 0.0
        %763 = vmatprep.subr.mxu0 0.0
        %764 = vmatpush1.msra.mxu0 0.0
        %765 = vmatprep.subr.mxu0 0.0
        %766 = vmatpush1.msra.mxu0 0.0
        %767 = vmatprep.subr.mxu0 0.0
        %768 = vmatpush1.msra.mxu0 0.0
        %769 = vmatprep.subr.mxu0 0.0
        %770 = vmatpush1.msra.mxu0 0.0
        %771 = vmatprep.subr.mxu0 0.0
        %772 = vmatpush1.msra.mxu0 0.0
        %773 = vmatprep.subr.mxu0 0.0
        %774 = vmatpush1.msra.mxu0 0.0
        %775 = vmatprep.subr.mxu0 0.0
        %776 = vmatpush1.msra.mxu0 0.0
        %777 = vmatprep.subr.mxu0 0.0
        %778 = vmatpush1.msra.mxu0 0.0
        %779 = vmatprep.subr.mxu0 0.0
        %780 = vmatpush1.msra.mxu0 0.0
        %781 = vmatprep.subr.mxu0 0.0
        %782 = vmatpush1.msra.mxu0 0.0
        %783 = vmatprep.subr.mxu0 0.0
        %784 = vmatpush1.msra.mxu0 0.0
        %785 = vmatprep.subr.mxu0 0.0
        %786 = vmatpush1.msra.mxu0 0.0
        %787 = vmatprep.subr.mxu0 0.0
        %788 = vmatpush1.msra.mxu0 0.0
        %789 = vmatprep.subr.mxu0 0.0
        %790 = vmatpush1.msra.mxu0 0.0
        %791 = vmatprep.subr.mxu0 0.0
        %792 = vmatpush1.msra.mxu0 0.0
        %793 = vmatprep.subr.mxu0 0.0
        %794 = vmatpush1.msra.mxu0 0.0
        %795 = vmatprep.subr.mxu0 0.0
        %796 = vmatpush1.msra.mxu0 0.0
        %797 = vmatprep.subr.mxu0 0.0
        %798 = vmatpush1.msra.mxu0 0.0
        %799 = vmatprep.subr.mxu0 0.0
        %800 = vmatpush1.msra.mxu0 0.0
        %801 = vmatprep.subr.mxu0 0.0
        %802 = vmatpush1.msra.mxu0 0.0
        %803 = vmatprep.subr.mxu0 0.0
        %804 = vmatpush1.msra.mxu0 0.0
        %805 = vmatprep.subr.mxu0 0.0
        %806 = vmatpush1.msra.mxu0 0.0
        %807 = vmatprep.subr.mxu0 0.0
        %808 = vmatpush1.msra.mxu0 0.0
        %809 = vmatprep.subr.mxu0 0.0
        %810 = vmatpush1.msra.mxu0 0.0
        %811 = vmatprep.subr.mxu0 0.0
        %812 = vmatpush1.msra.mxu0 0.0
        %813 = vmatprep.mubr.f32.mxu0 0.0
        %814 = vmatmul.mubr.f32.gmra.mrb[0].mxu0 %v744
        %v815 = vpop.f32.mrb[0].mxu0
        %v816 = vadd.f32 0.0, %v815
        %v817 = vpop.f32.mrb[0].mxu0
        %818 = vmatprep.mubr.f32.mxu0 0.0
        %819 = vmatmul.mubr.f32.gmra.mrb[0].mxu0 %v747
        %v820 = vpop.f32.mrb[0].mxu0
        %v821 = vadd.f32 0.0, %v820
        %v822 = vpop.f32.mrb[0].mxu0
        %823 = vdwg.mxu0
        %v824 = vadd.f32 %v735, %v816
        %v825 = vadd.f32 %v740, %v821
        %v827 = vsel %vm661, %v647, 0
        %v830 = vsel %vm661, %v652, 0
        %832 = vmatprep.subr.mxu0 0.0
        %833 = vmatpush1.msra.mxu0 %v555
        %834 = vmatprep.subr.mxu0 0.0
        %835 = vmatpush1.msra.mxu0 0.0
        %836 = vmatprep.subr.mxu0 0.0
        %837 = vmatpush1.msra.mxu0 0.0
        %838 = vmatprep.subr.mxu0 0.0
        %839 = vmatpush1.msra.mxu0 0.0
        %840 = vmatprep.subr.mxu0 0.0
        %841 = vmatpush1.msra.mxu0 0.0
        %842 = vmatprep.subr.mxu0 0.0
        %843 = vmatpush1.msra.mxu0 0.0
        %844 = vmatprep.subr.mxu0 0.0
        %845 = vmatpush1.msra.mxu0 0.0
        %846 = vmatprep.subr.mxu0 0.0
        %847 = vmatpush1.msra.mxu0 0.0
        %848 = vmatprep.subr.mxu0 0.0
        %849 = vmatpush1.msra.mxu0 0.0
        %850 = vmatprep.subr.mxu0 0.0
        %851 = vmatpush1.msra.mxu0 0.0
        %852 = vmatprep.subr.mxu0 0.0
        %853 = vmatpush1.msra.mxu0 0.0
        %854 = vmatprep.subr.mxu0 0.0
        %855 = vmatpush1.msra.mxu0 0.0
        %856 = vmatprep.subr.mxu0 0.0
        %857 = vmatpush1.msra.mxu0 0.0
        %858 = vmatprep.subr.mxu0 0.0
        %859 = vmatpush1.msra.mxu0 0.0
        %860 = vmatprep.subr.mxu0 0.0
        %861 = vmatpush1.msra.mxu0 0.0
        %862 = vmatprep.subr.mxu0 0.0
        %863 = vmatpush1.msra.mxu0 0.0
        %864 = vmatprep.subr.mxu0 0.0
        %865 = vmatpush1.msra.mxu0 0.0
        %866 = vmatprep.subr.mxu0 0.0
        %867 = vmatpush1.msra.mxu0 0.0
        %868 = vmatprep.subr.mxu0 0.0
        %869 = vmatpush1.msra.mxu0 0.0
        %870 = vmatprep.subr.mxu0 0.0
        %871 = vmatpush1.msra.mxu0 0.0
        %872 = vmatprep.subr.mxu0 0.0
        %873 = vmatpush1.msra.mxu0 0.0
        %874 = vmatprep.subr.mxu0 0.0
        %875 = vmatpush1.msra.mxu0 0.0
        %876 = vmatprep.subr.mxu0 0.0
        %877 = vmatpush1.msra.mxu0 0.0
        %878 = vmatprep.subr.mxu0 0.0
        %879 = vmatpush1.msra.mxu0 0.0
        %880 = vmatprep.subr.mxu0 0.0
        %881 = vmatpush1.msra.mxu0 0.0
        %882 = vmatprep.subr.mxu0 0.0
        %883 = vmatpush1.msra.mxu0 0.0
        %884 = vmatprep.subr.mxu0 0.0
        %885 = vmatpush1.msra.mxu0 0.0
        %886 = vmatprep.subr.mxu0 0.0
        %887 = vmatpush1.msra.mxu0 0.0
        %888 = vmatprep.subr.mxu0 0.0
        %889 = vmatpush1.msra.mxu0 0.0
        %890 = vmatprep.subr.mxu0 0.0
        %891 = vmatpush1.msra.mxu0 0.0
        %892 = vmatprep.subr.mxu0 0.0
        %893 = vmatpush1.msra.mxu0 0.0
        %894 = vmatprep.subr.mxu0 0.0
        %895 = vmatpush1.msra.mxu0 0.0
        %896 = vmatprep.mubr.f32.mxu0 0.0
        %897 = vmatmul.mubr.f32.gmra.mrb[0].mxu0 %v827
        %v898 = vpop.f32.mrb[0].mxu0
        %v899 = vadd.f32 0.0, %v898
        %v900 = vpop.f32.mrb[0].mxu0
        %901 = vmatprep.mubr.f32.mxu0 0.0
        %902 = vmatmul.mubr.f32.gmra.mrb[0].mxu0 %v830
        %v903 = vpop.f32.mrb[0].mxu0
        %v904 = vadd.f32 0.0, %v903
        %v905 = vpop.f32.mrb[0].mxu0
        %906 = vdwg.mxu0
        %v907 = vadd.f32 %v824, %v899
        %v908 = vadd.f32 %v825, %v904
        %v909 = vmax.f32 %v907, 0.0
        %v910 = vmax.f32 %v908, 0.0
        %v911 = vld [vmem:[#allocation7] sm:$0xff]
        %v912 = vld [vmem:[#allocation7 + $0x8] sm:$0xff]
        %v913 = vld [vmem:[%s6] sm:$0xff]
        %v914 = vld [vmem:[%s6 + $0x8] sm:$0xff]
        %v915 = vld [vmem:[%s6 + $0x10] sm:$0xff]
        %v916 = vld [vmem:[%s6 + $0x18] sm:$0xff]
        %v917 = vld [vmem:[%s7] sm:$0x1]
        %918 = vmatprep.subr.mxu0 0.0
        %919 = vmatpush1.msra.mxu0 %v909
        %920 = vmatprep.subr.mxu0 0.0
        %921 = vmatpush1.msra.mxu0 %v910
        %922 = vmatprep.subr.mxu0 0.0
        %923 = vmatpush1.msra.mxu0 0.0
        %924 = vmatprep.subr.mxu0 0.0
        %925 = vmatpush1.msra.mxu0 0.0
        %926 = vmatprep.subr.mxu0 0.0
        %927 = vmatpush1.msra.mxu0 0.0
        %928 = vmatprep.subr.mxu0 0.0
        %929 = vmatpush1.msra.mxu0 0.0
        %930 = vmatprep.subr.mxu0 0.0
        %931 = vmatpush1.msra.mxu0 0.0
        %932 = vmatprep.subr.mxu0 0.0
        %933 = vmatpush1.msra.mxu0 0.0
        %934 = vmatprep.subr.mxu0 0.0
        %935 = vmatpush1.msra.mxu0 0.0
        %936 = vmatprep.subr.mxu0 0.0
        %937 = vmatpush1.msra.mxu0 0.0
        %938 = vmatprep.subr.mxu0 0.0
        %939 = vmatpush1.msra.mxu0 0.0
        %940 = vmatprep.subr.mxu0 0.0
        %941 = vmatpush1.msra.mxu0 0.0
        %942 = vmatprep.subr.mxu0 0.0
        %943 = vmatpush1.msra.mxu0 0.0
        %944 = vmatprep.subr.mxu0 0.0
        %945 = vmatpush1.msra.mxu0 0.0
        %946 = vmatprep.subr.mxu0 0.0
        %947 = vmatpush1.msra.mxu0 0.0
        %948 = vmatprep.subr.mxu0 0.0
        %949 = vmatpush1.msra.mxu0 0.0
        %950 = vmatprep.subr.mxu0 0.0
        %951 = vmatpush1.msra.mxu0 0.0
        %952 = vmatprep.subr.mxu0 0.0
        %953 = vmatpush1.msra.mxu0 0.0
        %954 = vmatprep.subr.mxu0 0.0
        %955 = vmatpush1.msra.mxu0 0.0
        %956 = vmatprep.subr.mxu0 0.0
        %957 = vmatpush1.msra.mxu0 0.0
        %958 = vmatprep.subr.mxu0 0.0
        %959 = vmatpush1.msra.mxu0 0.0
        %960 = vmatprep.subr.mxu0 0.0
        %961 = vmatpush1.msra.mxu0 0.0
        %962 = vmatprep.subr.mxu0 0.0
        %963 = vmatpush1.msra.mxu0 0.0
        %964 = vmatprep.subr.mxu0 0.0
        %965 = vmatpush1.msra.mxu0 0.0
        %966 = vmatprep.subr.mxu0 0.0
        %967 = vmatpush1.msra.mxu0 0.0
        %968 = vmatprep.subr.mxu0 0.0
        %969 = vmatpush1.msra.mxu0 0.0
        %970 = vmatprep.subr.mxu0 0.0
        %971 = vmatpush1.msra.mxu0 0.0
        %972 = vmatprep.subr.mxu0 0.0
        %973 = vmatpush1.msra.mxu0 0.0
        %974 = vmatprep.subr.mxu0 0.0
        %975 = vmatpush1.msra.mxu0 0.0
        %976 = vmatprep.subr.mxu0 0.0
        %977 = vmatpush1.msra.mxu0 0.0
        %978 = vmatprep.subr.mxu0 0.0
        %979 = vmatpush1.msra.mxu0 0.0
        %980 = vmatprep.subr.mxu0 0.0
        %981 = vmatpush1.msra.mxu0 0.0
        %982 = vmatprep.mubr.f32.mxu0 0.0
        %983 = vmatmul.mubr.f32.gmra.mrb[0].mxu0 %v559
        %v984 = vpop.f32.mrb[0].mxu0
        %v985 = vadd.f32 0.0, %v984
        %v986 = vpop.f32.mrb[0].mxu0
        %987 = vmatprep.mubr.f32.mxu0 0.0
        %988 = vmatmul.mubr.f32.gmra.mrb[0].mxu0 %v562
        %v989 = vpop.f32.mrb[0].mxu0
        %v990 = vadd.f32 0.0, %v989
        %v991 = vpop.f32.mrb[0].mxu0
        %992 = vmatprep.mubr.f32.mxu0 0.0
        %993 = vmatmul.mubr.f32.gmra.mrb[0].mxu0 %v565
        %v994 = vpop.f32.mrb[0].mxu0
        %v995 = vadd.f32 0.0, %v994
        %v996 = vpop.f32.mrb[0].mxu0
        %997 = vmatprep.mubr.f32.mxu0 0.0
        %998 = vmatmul.mubr.f32.gmra.mrb[0].mxu0 %v568
        %v999 = vpop.f32.mrb[0].mxu0
        %v1000 = vadd.f32 0.0, %v999
        %v1001 = vpop.f32.mrb[0].mxu0
        %1002 = vdwg.mxu0
        %v1004 = vlaneseq
        %v1005 = vshrl.u32 %v1004, 7
        %v1006 = vsub.s32 0, %v1005
        %v1007 = vrot.slane %v917, %v1006
        %v1010 = vsel %vm557, %v909, 0
        %v1013 = vsel %vm557, %v910, 0
        %1015 = vmatprep.subr.mxu0 0.0
        %1016 = vmatpush1.msra.mxu0 %v911
        %1017 = vmatprep.subr.mxu0 0.0
        %1018 = vmatpush1.msra.mxu0 %v912
        %1019 = vmatprep.subr.mxu0 0.0
        %1020 = vmatpush1.msra.mxu0 0.0
        %1021 = vmatprep.subr.mxu0 0.0
        %1022 = vmatpush1.msra.mxu0 0.0
        %1023 = vmatprep.subr.mxu0 0.0
        %1024 = vmatpush1.msra.mxu0 0.0
        %1025 = vmatprep.subr.mxu0 0.0
        %1026 = vmatpush1.msra.mxu0 0.0
        %1027 = vmatprep.subr.mxu0 0.0
        %1028 = vmatpush1.msra.mxu0 0.0
        %1029 = vmatprep.subr.mxu0 0.0
        %1030 = vmatpush1.msra.mxu0 0.0
        %1031 = vmatprep.subr.mxu0 0.0
        %1032 = vmatpush1.msra.mxu0 0.0
        %1033 = vmatprep.subr.mxu0 0.0
        %1034 = vmatpush1.msra.mxu0 0.0
        %1035 = vmatprep.subr.mxu0 0.0
        %1036 = vmatpush1.msra.mxu0 0.0
        %1037 = vmatprep.subr.mxu0 0.0
        %1038 = vmatpush1.msra.mxu0 0.0
        %1039 = vmatprep.subr.mxu0 0.0
        %1040 = vmatpush1.msra.mxu0 0.0
        %1041 = vmatprep.subr.mxu0 0.0
        %1042 = vmatpush1.msra.mxu0 0.0
        %1043 = vmatprep.subr.mxu0 0.0
        %1044 = vmatpush1.msra.mxu0 0.0
        %1045 = vmatprep.subr.mxu0 0.0
        %1046 = vmatpush1.msra.mxu0 0.0
        %1047 = vmatprep.subr.mxu0 0.0
        %1048 = vmatpush1.msra.mxu0 0.0
        %1049 = vmatprep.subr.mxu0 0.0
        %1050 = vmatpush1.msra.mxu0 0.0
        %1051 = vmatprep.subr.mxu0 0.0
        %1052 = vmatpush1.msra.mxu0 0.0
        %1053 = vmatprep.subr.mxu0 0.0
        %1054 = vmatpush1.msra.mxu0 0.0
        %1055 = vmatprep.subr.mxu0 0.0
        %1056 = vmatpush1.msra.mxu0 0.0
        %1057 = vmatprep.subr.mxu0 0.0
        %1058 = vmatpush1.msra.mxu0 0.0
        %1059 = vmatprep.subr.mxu0 0.0
        %1060 = vmatpush1.msra.mxu0 0.0
        %1061 = vmatprep.subr.mxu0 0.0
        %1062 = vmatpush1.msra.mxu0 0.0
        %1063 = vmatprep.subr.mxu0 0.0
        %1064 = vmatpush1.msra.mxu0 0.0
        %1065 = vmatprep.subr.mxu0 0.0
        %1066 = vmatpush1.msra.mxu0 0.0
        %1067 = vmatprep.subr.mxu0 0.0
        %1068 = vmatpush1.msra.mxu0 0.0
        %1069 = vmatprep.subr.mxu0 0.0
        %1070 = vmatpush1.msra.mxu0 0.0
        %1071 = vmatprep.subr.mxu0 0.0
        %1072 = vmatpush1.msra.mxu0 0.0
        %1073 = vmatprep.subr.mxu0 0.0
        %1074 = vmatpush1.msra.mxu0 0.0
        %1075 = vmatprep.subr.mxu0 0.0
        %1076 = vmatpush1.msra.mxu0 0.0
        %1077 = vmatprep.subr.mxu0 0.0
        %1078 = vmatpush1.msra.mxu0 0.0
        %1079 = vmatprep.mubr.f32.mxu0 0.0
        %1080 = vmatmul.mubr.f32.gmra.mrb[0].mxu0 %v1010
        %v1081 = vpop.f32.mrb[0].mxu0
        %v1082 = vadd.f32 %v1007, %v1081
        %v1083 = vpop.f32.mrb[0].mxu0
        %1084 = vmatprep.mubr.f32.mxu0 0.0
        %1085 = vmatmul.mubr.f32.gmra.mrb[0].mxu0 %v1013
        %v1086 = vpop.f32.mrb[0].mxu0
        %v1087 = vadd.f32 %v1007, %v1086
        %v1088 = vpop.f32.mrb[0].mxu0
        %1089 = vdwg.mxu0
        %v1091 = vsel %vm557, %v985, 0
        %v1094 = vsel %vm557, %v990, 0
        %1096 = vmatprep.subr.mxu0 0.0
        %1097 = vmatpush1.msra.mxu0 %v913
        %1098 = vmatprep.subr.mxu0 0.0
        %1099 = vmatpush1.msra.mxu0 %v914
        %1100 = vmatprep.subr.mxu0 0.0
        %1101 = vmatpush1.msra.mxu0 0.0
        %1102 = vmatprep.subr.mxu0 0.0
        %1103 = vmatpush1.msra.mxu0 0.0
        %1104 = vmatprep.subr.mxu0 0.0
        %1105 = vmatpush1.msra.mxu0 0.0
        %1106 = vmatprep.subr.mxu0 0.0
        %1107 = vmatpush1.msra.mxu0 0.0
        %1108 = vmatprep.subr.mxu0 0.0
        %1109 = vmatpush1.msra.mxu0 0.0
        %1110 = vmatprep.subr.mxu0 0.0
        %1111 = vmatpush1.msra.mxu0 0.0
        %1112 = vmatprep.subr.mxu0 0.0
        %1113 = vmatpush1.msra.mxu0 0.0
        %1114 = vmatprep.subr.mxu0 0.0
        %1115 = vmatpush1.msra.mxu0 0.0
        %1116 = vmatprep.subr.mxu0 0.0
        %1117 = vmatpush1.msra.mxu0 0.0
        %1118 = vmatprep.subr.mxu0 0.0
        %1119 = vmatpush1.msra.mxu0 0.0
        %1120 = vmatprep.subr.mxu0 0.0
        %1121 = vmatpush1.msra.mxu0 0.0
        %1122 = vmatprep.subr.mxu0 0.0
        %1123 = vmatpush1.msra.mxu0 0.0
        %1124 = vmatprep.subr.mxu0 0.0
        %1125 = vmatpush1.msra.mxu0 0.0
        %1126 = vmatprep.subr.mxu0 0.0
        %1127 = vmatpush1.msra.mxu0 0.0
        %1128 = vmatprep.subr.mxu0 0.0
        %1129 = vmatpush1.msra.mxu0 0.0
        %1130 = vmatprep.subr.mxu0 0.0
        %1131 = vmatpush1.msra.mxu0 0.0
        %1132 = vmatprep.subr.mxu0 0.0
        %1133 = vmatpush1.msra.mxu0 0.0
        %1134 = vmatprep.subr.mxu0 0.0
        %1135 = vmatpush1.msra.mxu0 0.0
        %1136 = vmatprep.subr.mxu0 0.0
        %1137 = vmatpush1.msra.mxu0 0.0
        %1138 = vmatprep.subr.mxu0 0.0
        %1139 = vmatpush1.msra.mxu0 0.0
        %1140 = vmatprep.subr.mxu0 0.0
        %1141 = vmatpush1.msra.mxu0 0.0
        %1142 = vmatprep.subr.mxu0 0.0
        %1143 = vmatpush1.msra.mxu0 0.0
        %1144 = vmatprep.subr.mxu0 0.0
        %1145 = vmatpush1.msra.mxu0 0.0
        %1146 = vmatprep.subr.mxu0 0.0
        %1147 = vmatpush1.msra.mxu0 0.0
        %1148 = vmatprep.subr.mxu0 0.0
        %1149 = vmatpush1.msra.mxu0 0.0
        %1150 = vmatprep.subr.mxu0 0.0
        %1151 = vmatpush1.msra.mxu0 0.0
        %1152 = vmatprep.subr.mxu0 0.0
        %1153 = vmatpush1.msra.mxu0 0.0
        %1154 = vmatprep.subr.mxu0 0.0
        %1155 = vmatpush1.msra.mxu0 0.0
        %1156 = vmatprep.subr.mxu0 0.0
        %1157 = vmatpush1.msra.mxu0 0.0
        %1158 = vmatprep.subr.mxu0 0.0
        %1159 = vmatpush1.msra.mxu0 0.0
        %1160 = vmatprep.mubr.f32.mxu0 0.0
        %1161 = vmatmul.mubr.f32.gmra.mrb[0].mxu0 %v1091
        %v1162 = vpop.f32.mrb[0].mxu0
        %v1163 = vadd.f32 0.0, %v1162
        %v1164 = vpop.f32.mrb[0].mxu0
        %1165 = vmatprep.mubr.f32.mxu0 0.0
        %1166 = vmatmul.mubr.f32.gmra.mrb[0].mxu0 %v1094
        %v1167 = vpop.f32.mrb[0].mxu0
        %v1168 = vadd.f32 0.0, %v1167
        %v1169 = vpop.f32.mrb[0].mxu0
        %1170 = vdwg.mxu0
        %v1171 = vadd.f32 %v1082, %v1163
        %v1172 = vadd.f32 %v1087, %v1168
        %v1174 = vsel %vm557, %v995, 0
        %v1177 = vsel %vm557, %v1000, 0
        %1179 = vmatprep.subr.mxu0 0.0
        %1180 = vmatpush1.msra.mxu0 %v915
        %1181 = vmatprep.subr.mxu0 0.0
        %1182 = vmatpush1.msra.mxu0 %v916
        %1183 = vmatprep.subr.mxu0 0.0
        %1184 = vmatpush1.msra.mxu0 0.0
        %1185 = vmatprep.subr.mxu0 0.0
        %1186 = vmatpush1.msra.mxu0 0.0
        %1187 = vmatprep.subr.mxu0 0.0
        %1188 = vmatpush1.msra.mxu0 0.0
        %1189 = vmatprep.subr.mxu0 0.0
        %1190 = vmatpush1.msra.mxu0 0.0
        %1191 = vmatprep.subr.mxu0 0.0
        %1192 = vmatpush1.msra.mxu0 0.0
        %1193 = vmatprep.subr.mxu0 0.0
        %1194 = vmatpush1.msra.mxu0 0.0
        %1195 = vmatprep.subr.mxu0 0.0
        %1196 = vmatpush1.msra.mxu0 0.0
        %1197 = vmatprep.subr.mxu0 0.0
        %1198 = vmatpush1.msra.mxu0 0.0
        %1199 = vmatprep.subr.mxu0 0.0
        %1200 = vmatpush1.msra.mxu0 0.0
        %1201 = vmatprep.subr.mxu0 0.0
        %1202 = vmatpush1.msra.mxu0 0.0
        %1203 = vmatprep.subr.mxu0 0.0
        %1204 = vmatpush1.msra.mxu0 0.0
        %1205 = vmatprep.subr.mxu0 0.0
        %1206 = vmatpush1.msra.mxu0 0.0
        %1207 = vmatprep.subr.mxu0 0.0
        %1208 = vmatpush1.msra.mxu0 0.0
        %1209 = vmatprep.subr.mxu0 0.0
        %1210 = vmatpush1.msra.mxu0 0.0
        %1211 = vmatprep.subr.mxu0 0.0
        %1212 = vmatpush1.msra.mxu0 0.0
        %1213 = vmatprep.subr.mxu0 0.0
        %1214 = vmatpush1.msra.mxu0 0.0
        %1215 = vmatprep.subr.mxu0 0.0
        %1216 = vmatpush1.msra.mxu0 0.0
        %1217 = vmatprep.subr.mxu0 0.0
        %1218 = vmatpush1.msra.mxu0 0.0
        %1219 = vmatprep.subr.mxu0 0.0
        %1220 = vmatpush1.msra.mxu0 0.0
        %1221 = vmatprep.subr.mxu0 0.0
        %1222 = vmatpush1.msra.mxu0 0.0
        %1223 = vmatprep.subr.mxu0 0.0
        %1224 = vmatpush1.msra.mxu0 0.0
        %1225 = vmatprep.subr.mxu0 0.0
        %1226 = vmatpush1.msra.mxu0 0.0
        %1227 = vmatprep.subr.mxu0 0.0
        %1228 = vmatpush1.msra.mxu0 0.0
        %1229 = vmatprep.subr.mxu0 0.0
        %1230 = vmatpush1.msra.mxu0 0.0
        %1231 = vmatprep.subr.mxu0 0.0
        %1232 = vmatpush1.msra.mxu0 0.0
        %1233 = vmatprep.subr.mxu0 0.0
        %1234 = vmatpush1.msra.mxu0 0.0
        %1235 = vmatprep.subr.mxu0 0.0
        %1236 = vmatpush1.msra.mxu0 0.0
        %1237 = vmatprep.subr.mxu0 0.0
        %1238 = vmatpush1.msra.mxu0 0.0
        %1239 = vmatprep.subr.mxu0 0.0
        %1240 = vmatpush1.msra.mxu0 0.0
        %1241 = vmatprep.subr.mxu0 0.0
        %1242 = vmatpush1.msra.mxu0 0.0
        %1243 = vmatprep.mubr.f32.mxu0 0.0
        %1244 = vmatmul.mubr.f32.gmra.mrb[0].mxu0 %v1174
        %v1245 = vpop.f32.mrb[0].mxu0
        %v1246 = vadd.f32 0.0, %v1245
        %v1247 = vpop.f32.mrb[0].mxu0
        %1248 = vmatprep.mubr.f32.mxu0 0.0
        %1249 = vmatmul.mubr.f32.gmra.mrb[0].mxu0 %v1177
        %v1250 = vpop.f32.mrb[0].mxu0
        %v1251 = vadd.f32 0.0, %v1250
        %v1252 = vpop.f32.mrb[0].mxu0
        %1253 = vdwg.mxu0
        %v1254 = vadd.f32 %v1171, %v1246
        %v1255 = vadd.f32 %v1172, %v1251
        %v1256 = vmax.f32 %v1254, 0.0
        %v1257 = vmax.f32 %v1255, 0.0
        %v1258 = vld [vmem:[#allocation8] sm:$0xff]
        %v1259 = vld [vmem:[#allocation8 + $0x8] sm:$0xff]
        %v1260 = vld [vmem:[%s9] sm:$0xff]
        %v1261 = vld [vmem:[%s9 + $0x8] sm:$0xff]
        %v1262 = vld [vmem:[%s9 + $0x10] sm:$0xff]
        %v1263 = vld [vmem:[%s9 + $0x18] sm:$0xff]
        %v1264 = vld [vmem:[%s10] sm:$0x1]
        %1265 = vmatprep.subr.mxu0 0.0
        %1266 = vmatpush1.msra.mxu0 %v1256
        %1267 = vmatprep.subr.mxu0 0.0
        %1268 = vmatpush1.msra.mxu0 %v1257
        %1269 = vmatprep.subr.mxu0 0.0
        %1270 = vmatpush1.msra.mxu0 0.0
        %1271 = vmatprep.subr.mxu0 0.0
        %1272 = vmatpush1.msra.mxu0 0.0
        %1273 = vmatprep.subr.mxu0 0.0
        %1274 = vmatpush1.msra.mxu0 0.0
        %1275 = vmatprep.subr.mxu0 0.0
        %1276 = vmatpush1.msra.mxu0 0.0
        %1277 = vmatprep.subr.mxu0 0.0
        %1278 = vmatpush1.msra.mxu0 0.0
        %1279 = vmatprep.subr.mxu0 0.0
        %1280 = vmatpush1.msra.mxu0 0.0
        %1281 = vmatprep.subr.mxu0 0.0
        %1282 = vmatpush1.msra.mxu0 0.0
        %1283 = vmatprep.subr.mxu0 0.0
        %1284 = vmatpush1.msra.mxu0 0.0
        %1285 = vmatprep.subr.mxu0 0.0
        %1286 = vmatpush1.msra.mxu0 0.0
        %1287 = vmatprep.subr.mxu0 0.0
        %1288 = vmatpush1.msra.mxu0 0.0
        %1289 = vmatprep.subr.mxu0 0.0
        %1290 = vmatpush1.msra.mxu0 0.0
        %1291 = vmatprep.subr.mxu0 0.0
        %1292 = vmatpush1.msra.mxu0 0.0
        %1293 = vmatprep.subr.mxu0 0.0
        %1294 = vmatpush1.msra.mxu0 0.0
        %1295 = vmatprep.subr.mxu0 0.0
        %1296 = vmatpush1.msra.mxu0 0.0
        %1297 = vmatprep.subr.mxu0 0.0
        %1298 = vmatpush1.msra.mxu0 0.0
        %1299 = vmatprep.subr.mxu0 0.0
        %1300 = vmatpush1.msra.mxu0 0.0
        %1301 = vmatprep.subr.mxu0 0.0
        %1302 = vmatpush1.msra.mxu0 0.0
        %1303 = vmatprep.subr.mxu0 0.0
        %1304 = vmatpush1.msra.mxu0 0.0
        %1305 = vmatprep.subr.mxu0 0.0
        %1306 = vmatpush1.msra.mxu0 0.0
        %1307 = vmatprep.subr.mxu0 0.0
        %1308 = vmatpush1.msra.mxu0 0.0
        %1309 = vmatprep.subr.mxu0 0.0
        %1310 = vmatpush1.msra.mxu0 0.0
        %1311 = vmatprep.subr.mxu0 0.0
        %1312 = vmatpush1.msra.mxu0 0.0
        %1313 = vmatprep.subr.mxu0 0.0
        %1314 = vmatpush1.msra.mxu0 0.0
        %1315 = vmatprep.subr.mxu0 0.0
        %1316 = vmatpush1.msra.mxu0 0.0
        %1317 = vmatprep.subr.mxu0 0.0
        %1318 = vmatpush1.msra.mxu0 0.0
        %1319 = vmatprep.subr.mxu0 0.0
        %1320 = vmatpush1.msra.mxu0 0.0
        %1321 = vmatprep.subr.mxu0 0.0
        %1322 = vmatpush1.msra.mxu0 0.0
        %1323 = vmatprep.subr.mxu0 0.0
        %1324 = vmatpush1.msra.mxu0 0.0
        %1325 = vmatprep.subr.mxu0 0.0
        %1326 = vmatpush1.msra.mxu0 0.0
        %1327 = vmatprep.subr.mxu0 0.0
        %1328 = vmatpush1.msra.mxu0 0.0
        %1329 = vmatprep.mubr.f32.mxu0 0.0
        %1330 = vmatmul.mubr.f32.gmra.mrb[0].mxu0 %v559
        %v1331 = vpop.f32.mrb[0].mxu0
        %v1332 = vadd.f32 0.0, %v1331
        %v1333 = vpop.f32.mrb[0].mxu0
        %1334 = vmatprep.mubr.f32.mxu0 0.0
        %1335 = vmatmul.mubr.f32.gmra.mrb[0].mxu0 %v562
        %v1336 = vpop.f32.mrb[0].mxu0
        %v1337 = vadd.f32 0.0, %v1336
        %v1338 = vpop.f32.mrb[0].mxu0
        %1339 = vmatprep.mubr.f32.mxu0 0.0
        %1340 = vmatmul.mubr.f32.gmra.mrb[0].mxu0 %v565
        %v1341 = vpop.f32.mrb[0].mxu0
        %v1342 = vadd.f32 0.0, %v1341
        %v1343 = vpop.f32.mrb[0].mxu0
        %1344 = vmatprep.mubr.f32.mxu0 0.0
        %1345 = vmatmul.mubr.f32.gmra.mrb[0].mxu0 %v568
        %v1346 = vpop.f32.mrb[0].mxu0
        %v1347 = vadd.f32 0.0, %v1346
        %v1348 = vpop.f32.mrb[0].mxu0
        %1349 = vdwg.mxu0
        %v1351 = vlaneseq
        %v1352 = vshrl.u32 %v1351, 7
        %v1353 = vsub.s32 0, %v1352
        %v1354 = vrot.slane %v1264, %v1353
        %v1357 = vsel %vm557, %v1256, 0
        %v1360 = vsel %vm557, %v1257, 0
        %1362 = vmatprep.subr.mxu0 0.0
        %1363 = vmatpush1.msra.mxu0 %v1258
        %1364 = vmatprep.subr.mxu0 0.0
        %1365 = vmatpush1.msra.mxu0 %v1259
        %1366 = vmatprep.subr.mxu0 0.0
        %1367 = vmatpush1.msra.mxu0 0.0
        %1368 = vmatprep.subr.mxu0 0.0
        %1369 = vmatpush1.msra.mxu0 0.0
        %1370 = vmatprep.subr.mxu0 0.0
        %1371 = vmatpush1.msra.mxu0 0.0
        %1372 = vmatprep.subr.mxu0 0.0
        %1373 = vmatpush1.msra.mxu0 0.0
        %1374 = vmatprep.subr.mxu0 0.0
        %1375 = vmatpush1.msra.mxu0 0.0
        %1376 = vmatprep.subr.mxu0 0.0
        %1377 = vmatpush1.msra.mxu0 0.0
        %1378 = vmatprep.subr.mxu0 0.0
        %1379 = vmatpush1.msra.mxu0 0.0
        %1380 = vmatprep.subr.mxu0 0.0
        %1381 = vmatpush1.msra.mxu0 0.0
        %1382 = vmatprep.subr.mxu0 0.0
        %1383 = vmatpush1.msra.mxu0 0.0
        %1384 = vmatprep.subr.mxu0 0.0
        %1385 = vmatpush1.msra.mxu0 0.0
        %1386 = vmatprep.subr.mxu0 0.0
        %1387 = vmatpush1.msra.mxu0 0.0
        %1388 = vmatprep.subr.mxu0 0.0
        %1389 = vmatpush1.msra.mxu0 0.0
        %1390 = vmatprep.subr.mxu0 0.0
        %1391 = vmatpush1.msra.mxu0 0.0
        %1392 = vmatprep.subr.mxu0 0.0
        %1393 = vmatpush1.msra.mxu0 0.0
        %1394 = vmatprep.subr.mxu0 0.0
        %1395 = vmatpush1.msra.mxu0 0.0
        %1396 = vmatprep.subr.mxu0 0.0
        %1397 = vmatpush1.msra.mxu0 0.0
        %1398 = vmatprep.subr.mxu0 0.0
        %1399 = vmatpush1.msra.mxu0 0.0
        %1400 = vmatprep.subr.mxu0 0.0
        %1401 = vmatpush1.msra.mxu0 0.0
        %1402 = vmatprep.subr.mxu0 0.0
        %1403 = vmatpush1.msra.mxu0 0.0
        %1404 = vmatprep.subr.mxu0 0.0
        %1405 = vmatpush1.msra.mxu0 0.0
        %1406 = vmatprep.subr.mxu0 0.0
        %1407 = vmatpush1.msra.mxu0 0.0
        %1408 = vmatprep.subr.mxu0 0.0
        %1409 = vmatpush1.msra.mxu0 0.0
        %1410 = vmatprep.subr.mxu0 0.0
        %1411 = vmatpush1.msra.mxu0 0.0
        %1412 = vmatprep.subr.mxu0 0.0
        %1413 = vmatpush1.msra.mxu0 0.0
        %1414 = vmatprep.subr.mxu0 0.0
        %1415 = vmatpush1.msra.mxu0 0.0
        %1416 = vmatprep.subr.mxu0 0.0
        %1417 = vmatpush1.msra.mxu0 0.0
        %1418 = vmatprep.subr.mxu0 0.0
        %1419 = vmatpush1.msra.mxu0 0.0
        %1420 = vmatprep.subr.mxu0 0.0
        %1421 = vmatpush1.msra.mxu0 0.0
        %1422 = vmatprep.subr.mxu0 0.0
        %1423 = vmatpush1.msra.mxu0 0.0
        %1424 = vmatprep.subr.mxu0 0.0
        %1425 = vmatpush1.msra.mxu0 0.0
        %1426 = vmatprep.mubr.f32.mxu0 0.0
        %1427 = vmatmul.mubr.f32.gmra.mrb[0].mxu0 %v1357
        %v1428 = vpop.f32.mrb[0].mxu0
        %v1429 = vadd.f32 %v1354, %v1428
        %v1430 = vpop.f32.mrb[0].mxu0
        %1431 = vmatprep.mubr.f32.mxu0 0.0
        %1432 = vmatmul.mubr.f32.gmra.mrb[0].mxu0 %v1360
        %v1433 = vpop.f32.mrb[0].mxu0
        %v1434 = vadd.f32 %v1354, %v1433
        %v1435 = vpop.f32.mrb[0].mxu0
        %1436 = vdwg.mxu0
        %v1438 = vsel %vm557, %v1332, 0
        %v1441 = vsel %vm557, %v1337, 0
        %1443 = vmatprep.subr.mxu0 0.0
        %1444 = vmatpush1.msra.mxu0 %v1260
        %1445 = vmatprep.subr.mxu0 0.0
        %1446 = vmatpush1.msra.mxu0 %v1261
        %1447 = vmatprep.subr.mxu0 0.0
        %1448 = vmatpush1.msra.mxu0 0.0
        %1449 = vmatprep.subr.mxu0 0.0
        %1450 = vmatpush1.msra.mxu0 0.0
        %1451 = vmatprep.subr.mxu0 0.0
        %1452 = vmatpush1.msra.mxu0 0.0
        %1453 = vmatprep.subr.mxu0 0.0
        %1454 = vmatpush1.msra.mxu0 0.0
        %1455 = vmatprep.subr.mxu0 0.0
        %1456 = vmatpush1.msra.mxu0 0.0
        %1457 = vmatprep.subr.mxu0 0.0
        %1458 = vmatpush1.msra.mxu0 0.0
        %1459 = vmatprep.subr.mxu0 0.0
        %1460 = vmatpush1.msra.mxu0 0.0
        %1461 = vmatprep.subr.mxu0 0.0
        %1462 = vmatpush1.msra.mxu0 0.0
        %1463 = vmatprep.subr.mxu0 0.0
        %1464 = vmatpush1.msra.mxu0 0.0
        %1465 = vmatprep.subr.mxu0 0.0
        %1466 = vmatpush1.msra.mxu0 0.0
        %1467 = vmatprep.subr.mxu0 0.0
        %1468 = vmatpush1.msra.mxu0 0.0
        %1469 = vmatprep.subr.mxu0 0.0
        %1470 = vmatpush1.msra.mxu0 0.0
        %1471 = vmatprep.subr.mxu0 0.0
        %1472 = vmatpush1.msra.mxu0 0.0
        %1473 = vmatprep.subr.mxu0 0.0
        %1474 = vmatpush1.msra.mxu0 0.0
        %1475 = vmatprep.subr.mxu0 0.0
        %1476 = vmatpush1.msra.mxu0 0.0
        %1477 = vmatprep.subr.mxu0 0.0
        %1478 = vmatpush1.msra.mxu0 0.0
        %1479 = vmatprep.subr.mxu0 0.0
        %1480 = vmatpush1.msra.mxu0 0.0
        %1481 = vmatprep.subr.mxu0 0.0
        %1482 = vmatpush1.msra.mxu0 0.0
        %1483 = vmatprep.subr.mxu0 0.0
        %1484 = vmatpush1.msra.mxu0 0.0
        %1485 = vmatprep.subr.mxu0 0.0
        %1486 = vmatpush1.msra.mxu0 0.0
        %1487 = vmatprep.subr.mxu0 0.0
        %1488 = vmatpush1.msra.mxu0 0.0
        %1489 = vmatprep.subr.mxu0 0.0
        %1490 = vmatpush1.msra.mxu0 0.0
        %1491 = vmatprep.subr.mxu0 0.0
        %1492 = vmatpush1.msra.mxu0 0.0
        %1493 = vmatprep.subr.mxu0 0.0
        %1494 = vmatpush1.msra.mxu0 0.0
        %1495 = vmatprep.subr.mxu0 0.0
        %1496 = vmatpush1.msra.mxu0 0.0
        %1497 = vmatprep.subr.mxu0 0.0
        %1498 = vmatpush1.msra.mxu0 0.0
        %1499 = vmatprep.subr.mxu0 0.0
        %1500 = vmatpush1.msra.mxu0 0.0
        %1501 = vmatprep.subr.mxu0 0.0
        %1502 = vmatpush1.msra.mxu0 0.0
        %1503 = vmatprep.subr.mxu0 0.0
        %1504 = vmatpush1.msra.mxu0 0.0
        %1505 = vmatprep.subr.mxu0 0.0
        %1506 = vmatpush1.msra.mxu0 0.0
        %1507 = vmatprep.mubr.f32.mxu0 0.0
        %1508 = vmatmul.mubr.f32.gmra.mrb[0].mxu0 %v1438
        %v1509 = vpop.f32.mrb[0].mxu0
        %v1510 = vadd.f32 0.0, %v1509
        %v1511 = vpop.f32.mrb[0].mxu0
        %1512 = vmatprep.mubr.f32.mxu0 0.0
        %1513 = vmatmul.mubr.f32.gmra.mrb[0].mxu0 %v1441
        %v1514 = vpop.f32.mrb[0].mxu0
        %v1515 = vadd.f32 0.0, %v1514
        %v1516 = vpop.f32.mrb[0].mxu0
        %1517 = vdwg.mxu0
        %v1518 = vadd.f32 %v1429, %v1510
        %v1519 = vadd.f32 %v1434, %v1515
        %v1521 = vsel %vm557, %v1342, 0
        %v1524 = vsel %vm557, %v1347, 0
        %1526 = vmatprep.subr.mxu0 0.0
        %1527 = vmatpush1.msra.mxu0 %v1262
        %1528 = vmatprep.subr.mxu0 0.0
        %1529 = vmatpush1.msra.mxu0 %v1263
        %1530 = vmatprep.subr.mxu0 0.0
        %1531 = vmatpush1.msra.mxu0 0.0
        %1532 = vmatprep.subr.mxu0 0.0
        %1533 = vmatpush1.msra.mxu0 0.0
        %1534 = vmatprep.subr.mxu0 0.0
        %1535 = vmatpush1.msra.mxu0 0.0
        %1536 = vmatprep.subr.mxu0 0.0
        %1537 = vmatpush1.msra.mxu0 0.0
        %1538 = vmatprep.subr.mxu0 0.0
        %1539 = vmatpush1.msra.mxu0 0.0
        %1540 = vmatprep.subr.mxu0 0.0
        %1541 = vmatpush1.msra.mxu0 0.0
        %1542 = vmatprep.subr.mxu0 0.0
        %1543 = vmatpush1.msra.mxu0 0.0
        %1544 = vmatprep.subr.mxu0 0.0
        %1545 = vmatpush1.msra.mxu0 0.0
        %1546 = vmatprep.subr.mxu0 0.0
        %1547 = vmatpush1.msra.mxu0 0.0
        %1548 = vmatprep.subr.mxu0 0.0
        %1549 = vmatpush1.msra.mxu0 0.0
        %1550 = vmatprep.subr.mxu0 0.0
        %1551 = vmatpush1.msra.mxu0 0.0
        %1552 = vmatprep.subr.mxu0 0.0
        %1553 = vmatpush1.msra.mxu0 0.0
        %1554 = vmatprep.subr.mxu0 0.0
        %1555 = vmatpush1.msra.mxu0 0.0
        %1556 = vmatprep.subr.mxu0 0.0
        %1557 = vmatpush1.msra.mxu0 0.0
        %1558 = vmatprep.subr.mxu0 0.0
        %1559 = vmatpush1.msra.mxu0 0.0
        %1560 = vmatprep.subr.mxu0 0.0
        %1561 = vmatpush1.msra.mxu0 0.0
        %1562 = vmatprep.subr.mxu0 0.0
        %1563 = vmatpush1.msra.mxu0 0.0
        %1564 = vmatprep.subr.mxu0 0.0
        %1565 = vmatpush1.msra.mxu0 0.0
        %1566 = vmatprep.subr.mxu0 0.0
        %1567 = vmatpush1.msra.mxu0 0.0
        %1568 = vmatprep.subr.mxu0 0.0
        %1569 = vmatpush1.msra.mxu0 0.0
        %1570 = vmatprep.subr.mxu0 0.0
        %1571 = vmatpush1.msra.mxu0 0.0
        %1572 = vmatprep.subr.mxu0 0.0
        %1573 = vmatpush1.msra.mxu0 0.0
        %1574 = vmatprep.subr.mxu0 0.0
        %1575 = vmatpush1.msra.mxu0 0.0
        %1576 = vmatprep.subr.mxu0 0.0
        %1577 = vmatpush1.msra.mxu0 0.0
        %1578 = vmatprep.subr.mxu0 0.0
        %1579 = vmatpush1.msra.mxu0 0.0
        %1580 = vmatprep.subr.mxu0 0.0
        %1581 = vmatpush1.msra.mxu0 0.0
        %1582 = vmatprep.subr.mxu0 0.0
        %1583 = vmatpush1.msra.mxu0 0.0
        %1584 = vmatprep.subr.mxu0 0.0
        %1585 = vmatpush1.msra.mxu0 0.0
        %1586 = vmatprep.subr.mxu0 0.0
        %1587 = vmatpush1.msra.mxu0 0.0
        %1588 = vmatprep.subr.mxu0 0.0
        %1589 = vmatpush1.msra.mxu0 0.0
        %1590 = vmatprep.mubr.f32.mxu0 0.0
        %1591 = vmatmul.mubr.f32.gmra.mrb[0].mxu0 %v1521
        %v1592 = vpop.f32.mrb[0].mxu0
        %v1593 = vadd.f32 0.0, %v1592
        %v1594 = vpop.f32.mrb[0].mxu0
        %1595 = vmatprep.mubr.f32.mxu0 0.0
        %1596 = vmatmul.mubr.f32.gmra.mrb[0].mxu0 %v1524
        %v1597 = vpop.f32.mrb[0].mxu0
        %v1598 = vadd.f32 0.0, %v1597
        %v1599 = vpop.f32.mrb[0].mxu0
        %1600 = vdwg.mxu0
        %v1601 = vadd.f32 %v1518, %v1593
        %v1602 = vadd.f32 %v1519, %v1598
        %v1603 = vmax.f32 %v1601, 0.0
        %v1604 = vmax.f32 %v1602, 0.0
        %v1605 = vld [vmem:[%s11] sm:$0xff]
        %v1606 = vld [vmem:[%s11 + $0x8] sm:$0xff]
        %v1607 = vld [vmem:[%s11 + $0x10] sm:$0xff]
        %v1608 = vld [vmem:[%s11 + $0x18] sm:$0xff]
        %v1609 = vld [vmem:[%s12] sm:$0xff]
        %v1610 = vld [vmem:[%s12 + $0x8] sm:$0xff]
        %v1611 = vld [vmem:[%s12 + $0x10] sm:$0xff]
        %v1612 = vld [vmem:[%s12 + $0x18] sm:$0xff]
        %v1613 = vld [vmem:[%s12 + $0x20] sm:$0xff]
        %v1614 = vld [vmem:[%s12 + $0x28] sm:$0xff]
        %v1615 = vld [vmem:[%s12 + $0x30] sm:$0xff]
        %v1616 = vld [vmem:[%s12 + $0x38] sm:$0xff]
        %v1617 = vld [vmem:[%s13] sm:$0x1]
        %1618 = vmatprep.subr.mxu0 0.0
        %1619 = vmatpush1.msra.mxu0 %v1603
        %1620 = vmatprep.subr.mxu0 0.0
        %1621 = vmatpush1.msra.mxu0 %v1604
        %1622 = vmatprep.subr.mxu0 0.0
        %1623 = vmatpush1.msra.mxu0 0.0
        %1624 = vmatprep.subr.mxu0 0.0
        %1625 = vmatpush1.msra.mxu0 0.0
        %1626 = vmatprep.subr.mxu0 0.0
        %1627 = vmatpush1.msra.mxu0 0.0
        %1628 = vmatprep.subr.mxu0 0.0
        %1629 = vmatpush1.msra.mxu0 0.0
        %1630 = vmatprep.subr.mxu0 0.0
        %1631 = vmatpush1.msra.mxu0 0.0
        %1632 = vmatprep.subr.mxu0 0.0
        %1633 = vmatpush1.msra.mxu0 0.0
        %1634 = vmatprep.subr.mxu0 0.0
        %1635 = vmatpush1.msra.mxu0 0.0
        %1636 = vmatprep.subr.mxu0 0.0
        %1637 = vmatpush1.msra.mxu0 0.0
        %1638 = vmatprep.subr.mxu0 0.0
        %1639 = vmatpush1.msra.mxu0 0.0
        %1640 = vmatprep.subr.mxu0 0.0
        %1641 = vmatpush1.msra.mxu0 0.0
        %1642 = vmatprep.subr.mxu0 0.0
        %1643 = vmatpush1.msra.mxu0 0.0
        %1644 = vmatprep.subr.mxu0 0.0
        %1645 = vmatpush1.msra.mxu0 0.0
        %1646 = vmatprep.subr.mxu0 0.0
        %1647 = vmatpush1.msra.mxu0 0.0
        %1648 = vmatprep.subr.mxu0 0.0
        %1649 = vmatpush1.msra.mxu0 0.0
        %1650 = vmatprep.subr.mxu0 0.0
        %1651 = vmatpush1.msra.mxu0 0.0
        %1652 = vmatprep.subr.mxu0 0.0
        %1653 = vmatpush1.msra.mxu0 0.0
        %1654 = vmatprep.subr.mxu0 0.0
        %1655 = vmatpush1.msra.mxu0 0.0
        %1656 = vmatprep.subr.mxu0 0.0
        %1657 = vmatpush1.msra.mxu0 0.0
        %1658 = vmatprep.subr.mxu0 0.0
        %1659 = vmatpush1.msra.mxu0 0.0
        %1660 = vmatprep.subr.mxu0 0.0
        %1661 = vmatpush1.msra.mxu0 0.0
        %1662 = vmatprep.subr.mxu0 0.0
        %1663 = vmatpush1.msra.mxu0 0.0
        %1664 = vmatprep.subr.mxu0 0.0
        %1665 = vmatpush1.msra.mxu0 0.0
        %1666 = vmatprep.subr.mxu0 0.0
        %1667 = vmatpush1.msra.mxu0 0.0
        %1668 = vmatprep.subr.mxu0 0.0
        %1669 = vmatpush1.msra.mxu0 0.0
        %1670 = vmatprep.subr.mxu0 0.0
        %1671 = vmatpush1.msra.mxu0 0.0
        %1672 = vmatprep.subr.mxu0 0.0
        %1673 = vmatpush1.msra.mxu0 0.0
        %1674 = vmatprep.subr.mxu0 0.0
        %1675 = vmatpush1.msra.mxu0 0.0
        %1676 = vmatprep.subr.mxu0 0.0
        %1677 = vmatpush1.msra.mxu0 0.0
        %1678 = vmatprep.subr.mxu0 0.0
        %1679 = vmatpush1.msra.mxu0 0.0
        %1680 = vmatprep.subr.mxu0 0.0
        %1681 = vmatpush1.msra.mxu0 0.0
        %1682 = vmatprep.mubr.f32.mxu0 0.0
        %1683 = vmatmul.mubr.f32.gmra.mrb[0].mxu0 %v559
        %v1684 = vpop.f32.mrb[0].mxu0
        %v1685 = vadd.f32 0.0, %v1684
        %v1686 = vpop.f32.mrb[0].mxu0
        %1687 = vmatprep.mubr.f32.mxu0 0.0
        %1688 = vmatmul.mubr.f32.gmra.mrb[0].mxu0 %v562
        %v1689 = vpop.f32.mrb[0].mxu0
        %v1690 = vadd.f32 0.0, %v1689
        %v1691 = vpop.f32.mrb[0].mxu0
        %1692 = vmatprep.mubr.f32.mxu0 0.0
        %1693 = vmatmul.mubr.f32.gmra.mrb[0].mxu0 %v565
        %v1694 = vpop.f32.mrb[0].mxu0
        %v1695 = vadd.f32 0.0, %v1694
        %v1696 = vpop.f32.mrb[0].mxu0
        %1697 = vmatprep.mubr.f32.mxu0 0.0
        %1698 = vmatmul.mubr.f32.gmra.mrb[0].mxu0 %v568
        %v1699 = vpop.f32.mrb[0].mxu0
        %v1700 = vadd.f32 0.0, %v1699
        %v1701 = vpop.f32.mrb[0].mxu0
        %1702 = vdwg.mxu0
        %v1704 = vlaneseq
        %v1705 = vshrl.u32 %v1704, 7
        %v1706 = vsub.s32 0, %v1705
        %v1707 = vrot.slane %v1617, %v1706
        %vm1709 = vcmask 261120
        %v1711 = vsel %vm1709, %v1603, 0
        %v1714 = vsel %vm1709, %v1604, 0
        %1716 = vmatprep.subr.mxu0 0.0
        %1717 = vmatpush1.msra.mxu0 %v1605
        %1718 = vmatprep.subr.mxu0 0.0
        %1719 = vmatpush1.msra.mxu0 %v1606
        %1720 = vmatprep.subr.mxu0 0.0
        %1721 = vmatpush1.msra.mxu0 %v1607
        %1722 = vmatprep.subr.mxu0 0.0
        %1723 = vmatpush1.msra.mxu0 %v1608
        %1724 = vmatprep.subr.mxu0 0.0
        %1725 = vmatpush1.msra.mxu0 0.0
        %1726 = vmatprep.subr.mxu0 0.0
        %1727 = vmatpush1.msra.mxu0 0.0
        %1728 = vmatprep.subr.mxu0 0.0
        %1729 = vmatpush1.msra.mxu0 0.0
        %1730 = vmatprep.subr.mxu0 0.0
        %1731 = vmatpush1.msra.mxu0 0.0
        %1732 = vmatprep.subr.mxu0 0.0
        %1733 = vmatpush1.msra.mxu0 0.0
        %1734 = vmatprep.subr.mxu0 0.0
        %1735 = vmatpush1.msra.mxu0 0.0
        %1736 = vmatprep.subr.mxu0 0.0
        %1737 = vmatpush1.msra.mxu0 0.0
        %1738 = vmatprep.subr.mxu0 0.0
        %1739 = vmatpush1.msra.mxu0 0.0
        %1740 = vmatprep.subr.mxu0 0.0
        %1741 = vmatpush1.msra.mxu0 0.0
        %1742 = vmatprep.subr.mxu0 0.0
        %1743 = vmatpush1.msra.mxu0 0.0
        %1744 = vmatprep.subr.mxu0 0.0
        %1745 = vmatpush1.msra.mxu0 0.0
        %1746 = vmatprep.subr.mxu0 0.0
        %1747 = vmatpush1.msra.mxu0 0.0
        %1748 = vmatprep.subr.mxu0 0.0
        %1749 = vmatpush1.msra.mxu0 0.0
        %1750 = vmatprep.subr.mxu0 0.0
        %1751 = vmatpush1.msra.mxu0 0.0
        %1752 = vmatprep.subr.mxu0 0.0
        %1753 = vmatpush1.msra.mxu0 0.0
        %1754 = vmatprep.subr.mxu0 0.0
        %1755 = vmatpush1.msra.mxu0 0.0
        %1756 = vmatprep.subr.mxu0 0.0
        %1757 = vmatpush1.msra.mxu0 0.0
        %1758 = vmatprep.subr.mxu0 0.0
        %1759 = vmatpush1.msra.mxu0 0.0
        %1760 = vmatprep.subr.mxu0 0.0
        %1761 = vmatpush1.msra.mxu0 0.0
        %1762 = vmatprep.subr.mxu0 0.0
        %1763 = vmatpush1.msra.mxu0 0.0
        %1764 = vmatprep.subr.mxu0 0.0
        %1765 = vmatpush1.msra.mxu0 0.0
        %1766 = vmatprep.subr.mxu0 0.0
        %1767 = vmatpush1.msra.mxu0 0.0
        %1768 = vmatprep.subr.mxu0 0.0
        %1769 = vmatpush1.msra.mxu0 0.0
        %1770 = vmatprep.subr.mxu0 0.0
        %1771 = vmatpush1.msra.mxu0 0.0
        %1772 = vmatprep.subr.mxu0 0.0
        %1773 = vmatpush1.msra.mxu0 0.0
        %1774 = vmatprep.subr.mxu0 0.0
        %1775 = vmatpush1.msra.mxu0 0.0
        %1776 = vmatprep.subr.mxu0 0.0
        %1777 = vmatpush1.msra.mxu0 0.0
        %1778 = vmatprep.subr.mxu0 0.0
        %1779 = vmatpush1.msra.mxu0 0.0
        %1780 = vmatprep.mubr.f32.mxu0 0.0
        %1781 = vmatmul.mubr.f32.gmra.mrb[0].mxu0 %v1711
        %v1782 = vpop.f32.mrb[0].mxu0
        %v1783 = vadd.f32 %v1707, %v1782
        %v1784 = vpop.f32.mrb[0].mxu0
        %1785 = vmatprep.mubr.f32.mxu0 0.0
        %1786 = vmatmul.mubr.f32.gmra.mrb[0].mxu0 %v1714
        %v1787 = vpop.f32.mrb[0].mxu0
        %v1788 = vadd.f32 %v1707, %v1787
        %v1789 = vpop.f32.mrb[0].mxu0
        %1790 = vdwg.mxu0
        %v1792 = vsel %vm1709, %v1685, 0
        %v1795 = vsel %vm1709, %v1690, 0
        %1797 = vmatprep.subr.mxu0 0.0
        %1798 = vmatpush1.msra.mxu0 %v1609
        %1799 = vmatprep.subr.mxu0 0.0
        %1800 = vmatpush1.msra.mxu0 %v1610
        %1801 = vmatprep.subr.mxu0 0.0
        %1802 = vmatpush1.msra.mxu0 %v1611
        %1803 = vmatprep.subr.mxu0 0.0
        %1804 = vmatpush1.msra.mxu0 %v1612
        %1805 = vmatprep.subr.mxu0 0.0
        %1806 = vmatpush1.msra.mxu0 0.0
        %1807 = vmatprep.subr.mxu0 0.0
        %1808 = vmatpush1.msra.mxu0 0.0
        %1809 = vmatprep.subr.mxu0 0.0
        %1810 = vmatpush1.msra.mxu0 0.0
        %1811 = vmatprep.subr.mxu0 0.0
        %1812 = vmatpush1.msra.mxu0 0.0
        %1813 = vmatprep.subr.mxu0 0.0
        %1814 = vmatpush1.msra.mxu0 0.0
        %1815 = vmatprep.subr.mxu0 0.0
        %1816 = vmatpush1.msra.mxu0 0.0
        %1817 = vmatprep.subr.mxu0 0.0
        %1818 = vmatpush1.msra.mxu0 0.0
        %1819 = vmatprep.subr.mxu0 0.0
        %1820 = vmatpush1.msra.mxu0 0.0
        %1821 = vmatprep.subr.mxu0 0.0
        %1822 = vmatpush1.msra.mxu0 0.0
        %1823 = vmatprep.subr.mxu0 0.0
        %1824 = vmatpush1.msra.mxu0 0.0
        %1825 = vmatprep.subr.mxu0 0.0
        %1826 = vmatpush1.msra.mxu0 0.0
        %1827 = vmatprep.subr.mxu0 0.0
        %1828 = vmatpush1.msra.mxu0 0.0
        %1829 = vmatprep.subr.mxu0 0.0
        %1830 = vmatpush1.msra.mxu0 0.0
        %1831 = vmatprep.subr.mxu0 0.0
        %1832 = vmatpush1.msra.mxu0 0.0
        %1833 = vmatprep.subr.mxu0 0.0
        %1834 = vmatpush1.msra.mxu0 0.0
        %1835 = vmatprep.subr.mxu0 0.0
        %1836 = vmatpush1.msra.mxu0 0.0
        %1837 = vmatprep.subr.mxu0 0.0
        %1838 = vmatpush1.msra.mxu0 0.0
        %1839 = vmatprep.subr.mxu0 0.0
        %1840 = vmatpush1.msra.mxu0 0.0
        %1841 = vmatprep.subr.mxu0 0.0
        %1842 = vmatpush1.msra.mxu0 0.0
        %1843 = vmatprep.subr.mxu0 0.0
        %1844 = vmatpush1.msra.mxu0 0.0
        %1845 = vmatprep.subr.mxu0 0.0
        %1846 = vmatpush1.msra.mxu0 0.0
        %1847 = vmatprep.subr.mxu0 0.0
        %1848 = vmatpush1.msra.mxu0 0.0
        %1849 = vmatprep.subr.mxu0 0.0
        %1850 = vmatpush1.msra.mxu0 0.0
        %1851 = vmatprep.subr.mxu0 0.0
        %1852 = vmatpush1.msra.mxu0 0.0
        %1853 = vmatprep.subr.mxu0 0.0
        %1854 = vmatpush1.msra.mxu0 0.0
        %1855 = vmatprep.subr.mxu0 0.0
        %1856 = vmatpush1.msra.mxu0 0.0
        %1857 = vmatprep.subr.mxu0 0.0
        %1858 = vmatpush1.msra.mxu0 0.0
        %1859 = vmatprep.subr.mxu0 0.0
        %1860 = vmatpush1.msra.mxu0 0.0
        %1861 = vmatprep.mubr.f32.mxu0 0.0
        %1862 = vmatmul.mubr.f32.gmra.mrb[0].mxu0 %v1792
        %v1863 = vpop.f32.mrb[0].mxu0
        %v1864 = vadd.f32 0.0, %v1863
        %v1865 = vpop.f32.mrb[0].mxu0
        %1866 = vmatprep.mubr.f32.mxu0 0.0
        %1867 = vmatmul.mubr.f32.gmra.mrb[0].mxu0 %v1795
        %v1868 = vpop.f32.mrb[0].mxu0
        %v1869 = vadd.f32 0.0, %v1868
        %v1870 = vpop.f32.mrb[0].mxu0
        %1871 = vdwg.mxu0
        %v1872 = vadd.f32 %v1783, %v1864
        %v1873 = vadd.f32 %v1788, %v1869
        %v1875 = vsel %vm1709, %v1695, 0
        %v1878 = vsel %vm1709, %v1700, 0
        %1880 = vmatprep.subr.mxu0 0.0
        %1881 = vmatpush1.msra.mxu0 %v1613
        %1882 = vmatprep.subr.mxu0 0.0
        %1883 = vmatpush1.msra.mxu0 %v1614
        %1884 = vmatprep.subr.mxu0 0.0
        %1885 = vmatpush1.msra.mxu0 %v1615
        %1886 = vmatprep.subr.mxu0 0.0
        %1887 = vmatpush1.msra.mxu0 %v1616
        %1888 = vmatprep.subr.mxu0 0.0
        %1889 = vmatpush1.msra.mxu0 0.0
        %1890 = vmatprep.subr.mxu0 0.0
        %1891 = vmatpush1.msra.mxu0 0.0
        %1892 = vmatprep.subr.mxu0 0.0
        %1893 = vmatpush1.msra.mxu0 0.0
        %1894 = vmatprep.subr.mxu0 0.0
        %1895 = vmatpush1.msra.mxu0 0.0
        %1896 = vmatprep.subr.mxu0 0.0
        %1897 = vmatpush1.msra.mxu0 0.0
        %1898 = vmatprep.subr.mxu0 0.0
        %1899 = vmatpush1.msra.mxu0 0.0
        %1900 = vmatprep.subr.mxu0 0.0
        %1901 = vmatpush1.msra.mxu0 0.0
        %1902 = vmatprep.subr.mxu0 0.0
        %1903 = vmatpush1.msra.mxu0 0.0
        %1904 = vmatprep.subr.mxu0 0.0
        %1905 = vmatpush1.msra.mxu0 0.0
        %1906 = vmatprep.subr.mxu0 0.0
        %1907 = vmatpush1.msra.mxu0 0.0
        %1908 = vmatprep.subr.mxu0 0.0
        %1909 = vmatpush1.msra.mxu0 0.0
        %1910 = vmatprep.subr.mxu0 0.0
        %1911 = vmatpush1.msra.mxu0 0.0
        %1912 = vmatprep.subr.mxu0 0.0
        %1913 = vmatpush1.msra.mxu0 0.0
        %1914 = vmatprep.subr.mxu0 0.0
        %1915 = vmatpush1.msra.mxu0 0.0
        %1916 = vmatprep.subr.mxu0 0.0
        %1917 = vmatpush1.msra.mxu0 0.0
        %1918 = vmatprep.subr.mxu0 0.0
        %1919 = vmatpush1.msra.mxu0 0.0
        %1920 = vmatprep.subr.mxu0 0.0
        %1921 = vmatpush1.msra.mxu0 0.0
        %1922 = vmatprep.subr.mxu0 0.0
        %1923 = vmatpush1.msra.mxu0 0.0
        %1924 = vmatprep.subr.mxu0 0.0
        %1925 = vmatpush1.msra.mxu0 0.0
        %1926 = vmatprep.subr.mxu0 0.0
        %1927 = vmatpush1.msra.mxu0 0.0
        %1928 = vmatprep.subr.mxu0 0.0
        %1929 = vmatpush1.msra.mxu0 0.0
        %1930 = vmatprep.subr.mxu0 0.0
        %1931 = vmatpush1.msra.mxu0 0.0
        %1932 = vmatprep.subr.mxu0 0.0
        %1933 = vmatpush1.msra.mxu0 0.0
        %1934 = vmatprep.subr.mxu0 0.0
        %1935 = vmatpush1.msra.mxu0 0.0
        %1936 = vmatprep.subr.mxu0 0.0
        %1937 = vmatpush1.msra.mxu0 0.0
        %1938 = vmatprep.subr.mxu0 0.0
        %1939 = vmatpush1.msra.mxu0 0.0
        %1940 = vmatprep.subr.mxu0 0.0
        %1941 = vmatpush1.msra.mxu0 0.0
        %1942 = vmatprep.subr.mxu0 0.0
        %1943 = vmatpush1.msra.mxu0 0.0
        %1944 = vmatprep.mubr.f32.mxu0 0.0
        %1945 = vmatmul.mubr.f32.gmra.mrb[0].mxu0 %v1875
        %v1946 = vpop.f32.mrb[0].mxu0
        %v1947 = vadd.f32 0.0, %v1946
        %v1948 = vpop.f32.mrb[0].mxu0
        %1949 = vmatprep.mubr.f32.mxu0 0.0
        %1950 = vmatmul.mubr.f32.gmra.mrb[0].mxu0 %v1878
        %v1951 = vpop.f32.mrb[0].mxu0
        %v1952 = vadd.f32 0.0, %v1951
        %v1953 = vpop.f32.mrb[0].mxu0
        %1954 = vdwg.mxu0
        %v1955 = vadd.f32 %v1872, %v1947
        %v1956 = vadd.f32 %v1873, %v1952
        %1957 = vst [vmem:[%s532] sm:$0xff] %v1955
        %1958 = vst [vmem:[%s532 + $0x8] sm:$0xff] %v1956
        %s1959 = sand.u32 %s343, 1
        %s1960 = scalar_lea.sflag [#allocation4], %s1959
        %s1961 = sand.u32 %s343, 1
        %s1962 = smul.addr %s1961, 16
        %s1963 = scalar_lea.vmem [#allocation10], %s1962
        // Predicated region
        $region93: #{tpu_custom_call.1} parent=75 // pred_check
          %p1964 = pneg %p353
        $region94: #{tpu_custom_call.1} parent=75 // pred_check_branch
          %1966 = sbr.rel (%p1964) target = $region96
        $region95: #{tpu_custom_call.1} parent=75 // pred_region
          %s1968 = ssub.s32 256, 256
          %1969 = vsyncadd %s1960, %s1968
          %s1970 = smul.addr %s31, 2
          %s1971 = smul.addr %s1970, 128
          %s1972 = scalar_lea.hbm %s14, %s1971
          %s1973 = sshll.u32 %s1963, 4
          %s1974 = int_to_ptr.vmem [resolvable:$true] %s1973
          %1979 = dma.vmem_to_hbm [thread:$0]  %s1974, 256, %s1972, %s1960, 128, 128, 8
        $region96: #{tpu_custom_call.1} parent=75 // pred_fallthru
          _
      $region76: #{tpu_custom_call.1} parent=5 // pred_fallthru
        _
      %p1980 = scmp.le.s32.totalorder 2, %s26
      // Predicated region
      $region97: #{tpu_custom_call.1} parent=5 // pred_check
        %p1981 = pneg %p1980
      $region98: #{tpu_custom_call.1} parent=5 // pred_check_branch
        %1983 = sbr.rel (%p1981) target = $region100
      $region99: #{tpu_custom_call.1} parent=5 // pred_region
        %s1984 = ssub.s32 %s26, 2
        // Predicated region
        $region101: #{tpu_custom_call.1} parent=99 // pred_check
          %p1985 = pneg %p359
        $region102: #{tpu_custom_call.1} parent=99 // pred_check_branch
          %1987 = sbr.rel (%p1985) target = $region104
        $region103: #{tpu_custom_call.1} parent=99 // pred_region
          %s1988 = sand.u32 %s344, 1
          %s1989 = scalar_lea.sflag [#allocation4], %s1988
          %s1990 = sand.u32 %s344, 1
          %s1991 = smul.addr %s1990, 16
          %s1992 = scalar_lea.vmem [#allocation10], %s1991
          %1993 = dma.done %s1989, 256
        $region104: #{tpu_custom_call.1} parent=99 // pred_fallthru
          _
      $region100: #{tpu_custom_call.1} parent=5 // pred_fallthru
        _
    $region6: #{tpu_custom_call.1} parent=1 // loop_footer
      %s30 = sadd.s32 1, %s26
    $region7: #{tpu_custom_call.1} parent=1 // loop_footer_branch
      %25 = sbr.rel target = $region3
    $region8: #{tpu_custom_call.1} parent=1 // loop_exit
      _
    %1994 = vsyncpa [#allocation3], 1
    %s1995 = scalar_lea.sflag [#allocation3], 1
    %1996 = vsyncpa %s1995, 1
    %1997 = vsyncpa [#allocation6], 1
    %1998 = vsyncpa [#allocation9], 1
    %1999 = vsyncpa [#allocation4], 1
    %s2000 = scalar_lea.sflag [#allocation4], 1
    %2001 = vsyncpa %s2000, 1

</llo_original>
